<compile_context>
chip_gen: v7x
topology: tpu7x:2x2x1
jax: 0.10.0
libtpu: 0.0.40
codegen_flags: <defaults>
</compile_context>

<pallas_src>
import functools
import math

import numpy as np
import jax
import jax.numpy as jnp
from jax import lax
from jax.experimental import pallas as pl
from jax.experimental.pallas import tpu as pltpu

SR = 16000
N_FFT = 400
HOP = 160
N_MELS = 128                 # librosa.feature.melspectrogram default
N_MFCC = 80
N_BINS = N_FFT // 2 + 1      # 201
N_BINS_PAD = 256             # lane-aligned frequency bins
N_MFCC_PAD = 128             # lane-dense output width
AMIN = 1e-10
TOP_DB = 80.0
TOP_DB_LIN = 10.0 ** (-TOP_DB / 10.0)     # 1e-8
DB_SCALE = 10.0 / math.log(10.0)          # 10 / ln(10)


# ---------------------------------------------------------------------------
# Deterministic basis construction (plain numpy glue)
# ---------------------------------------------------------------------------
def _hz_to_mel_slaney(freqs):
    freqs = np.asarray(freqs, dtype=np.float64)
    f_sp = 200.0 / 3
    mels = freqs / f_sp
    min_log_hz = 1000.0
    min_log_mel = min_log_hz / f_sp
    logstep = np.log(6.4) / 27.0
    log_t = freqs >= min_log_hz
    mels = np.where(
        log_t, min_log_mel + np.log(np.maximum(freqs, 1e-12) / min_log_hz) / logstep, mels
    )
    return mels


def _mel_to_hz_slaney(mels):
    mels = np.asarray(mels, dtype=np.float64)
    f_sp = 200.0 / 3
    freqs = f_sp * mels
    min_log_hz = 1000.0
    min_log_mel = min_log_hz / f_sp
    logstep = np.log(6.4) / 27.0
    log_t = mels >= min_log_mel
    freqs = np.where(log_t, min_log_hz * np.exp(logstep * (mels - min_log_mel)), freqs)
    return freqs


def mel_filterbank(sr=SR, n_fft=N_FFT, n_mels=N_MELS):
    fmin, fmax = 0.0, sr / 2.0
    fftfreqs = np.linspace(0.0, sr / 2.0, 1 + n_fft // 2)
    mel_min = _hz_to_mel_slaney(fmin)
    mel_max = _hz_to_mel_slaney(fmax)
    mel_f = _mel_to_hz_slaney(np.linspace(mel_min, mel_max, n_mels + 2))
    fdiff = np.diff(mel_f)
    ramps = mel_f[:, None] - fftfreqs[None, :]
    weights = np.zeros((n_mels, len(fftfreqs)), dtype=np.float64)
    for i in range(n_mels):
        lower = -ramps[i] / fdiff[i]
        upper = ramps[i + 2] / fdiff[i + 1]
        weights[i] = np.maximum(0.0, np.minimum(lower, upper))
    enorm = 2.0 / (mel_f[2: n_mels + 2] - mel_f[:n_mels])       # slaney norm
    weights *= enorm[:, None]
    return weights.astype(np.float32)                           # (n_mels, n_bins)


def mel_basis_padded():
    """(N_BINS_PAD, N_MELS): transposed slaney mel filterbank, bins padded 201->256."""
    w = mel_filterbank()
    out = np.zeros((N_BINS_PAD, N_MELS), dtype=np.float32)
    out[:N_BINS, :] = w.T
    return out


def dct_matrix_padded():
    """(N_MELS, N_MFCC_PAD): DCT-II norm='ortho' as a matmul matrix, cols padded 80->128."""
    n = np.arange(N_MELS, dtype=np.float64)[:, None]
    k = np.arange(N_MFCC, dtype=np.float64)[None, :]
    mat = 2.0 * np.cos(np.pi * k * (2.0 * n + 1.0) / (2.0 * N_MELS))
    scale = np.full((1, N_MFCC), np.sqrt(1.0 / (2.0 * N_MELS)))
    scale[0, 0] = np.sqrt(1.0 / (4.0 * N_MELS))
    out = np.zeros((N_MELS, N_MFCC_PAD), dtype=np.float32)
    out[:, :N_MFCC] = (mat * scale).astype(np.float32)
    return out


def dft_basis_padded():
    """(N_FFT, 2*N_BINS_PAD): [win*cos | win*sin] fused, 201 real bins padded to 256 each."""
    n = np.arange(N_FFT, dtype=np.float64)
    k = np.arange(N_BINS, dtype=np.float64)
    win = 0.5 - 0.5 * np.cos(2.0 * np.pi * n / N_FFT)           # periodic hann
    ang = 2.0 * np.pi * np.outer(n, k) / N_FFT
    basis = np.zeros((N_FFT, 2 * N_BINS_PAD), dtype=np.float64)
    basis[:, :N_BINS] = win[:, None] * np.cos(ang)
    basis[:, N_BINS_PAD: N_BINS_PAD + N_BINS] = win[:, None] * np.sin(ang)  # sign irrelevant for power
    return basis.astype(np.float32)


# ---------------------------------------------------------------------------
# Pallas kernel: one batch element (whole spectrogram) per grid step.
# Framing happens on-chip from hop-sized chunks; DFT / mel / DCT on the MXU.
# ---------------------------------------------------------------------------
def mfcc_kernel(chunks_ref, dft_ref, mel_ref, dct_ref, out_ref, *, n_valid_frames):
    f_pad = out_ref.shape[1]

    # (f_pad+2, 160); widen to f32 before the sublane-offset slices (cheapest,
    # most robust relayout path), cast back to bf16 for the MXU dots.
    chunks = chunks_ref[0].astype(jnp.float32)
    dft = dft_ref[...]                                          # (400, 512) bf16

    c0 = chunks[0:f_pad, :].astype(jnp.bfloat16)                # frame samples [0, 160)
    c1 = chunks[1:f_pad + 1, :].astype(jnp.bfloat16)            # frame samples [160, 320)
    c2 = chunks[2:f_pad + 2, :N_FFT - 2 * HOP].astype(jnp.bfloat16)   # samples [320, 400)

    # On-chip framing expressed as 3 partial DFT dots (total K = 400, same MACs
    # as the fused dot); bf16 in / f32 accumulate on the MXU.
    spec = jnp.dot(c0, dft[0:HOP, :], preferred_element_type=jnp.float32)
    spec = spec + jnp.dot(c1, dft[HOP:2 * HOP, :], preferred_element_type=jnp.float32)
    spec = spec + jnp.dot(c2, dft[2 * HOP:N_FFT, :], preferred_element_type=jnp.float32)
    # spec: (f_pad, 512) f32, [re | im] at lane-aligned offsets 0 / 256

    re = spec[:, :N_BINS_PAD]
    im = spec[:, N_BINS_PAD:]
    power = re * re + im * im                                   # (f_pad, 256) f32

    mel = jnp.dot(power.astype(jnp.bfloat16), mel_ref[...],
                  preferred_element_type=jnp.float32)           # (f_pad, 128) f32

    # power_to_db(ref=1, amin=1e-10, top_db=80) folded into one log pass:
    #   max(10*log10(max(mel, amin)), max_db - 80)
    #     == 10*log10(max(mel, max(amin, max_mel * 1e-8)))
    # The per-utterance max excludes padded / tail frames (mel >= 0 so masking
    # with 0 is safe and matches librosa's reference max exactly).
    row = lax.broadcasted_iota(jnp.int32, mel.shape, 0)
    m = jnp.max(jnp.where(row < n_valid_frames, mel, 0.0))
    floor = jnp.maximum(AMIN, m * TOP_DB_LIN)
    db = DB_SCALE * jnp.log(jnp.maximum(mel, floor))

    # DCT-II (ortho) in bf16 on the MXU; lane-dense 128-wide store (wrapper trims to 80).
    out_ref[0] = jnp.dot(db.astype(jnp.bfloat16), dct_ref[...],
                         preferred_element_type=jnp.float32)    # (f_pad, 128) f32


def _vmem_limit_bytes():
    """Generation-aware scoped-VMEM limit: ~40 MiB on v7x, 96 MiB on v5e/v6e."""
    try:
        cap = int(pltpu.get_tpu_info().vmem_capacity_bytes)
    except Exception:
        cap = 64 * 1024 * 1024          # conservative (v7x-sized) fallback
    return max(32 * 1024 * 1024, min(cap - 24 * 1024 * 1024, 96 * 1024 * 1024))


def mfcc_librosa_forward(feat, ilens=None):
    """feat: (B, T) float32 waveform -> (mfcc (B, F, 80) float32, lens (B,) int32)."""
    feat = feat.astype(jnp.float32)
    B, T = feat.shape
    n_frames = 1 + T // HOP
    # Pad frame count to a multiple of 128: keeps the MXU M dimension saturated
    # (v5e 128-wide MXU; amortizes fill/drain on v6e/v7x 256-wide MXUs).
    f_pad = max(128, ((n_frames + 127) // 128) * 128)

    # center padding (classic librosa.stft reflect padding)
    pad = N_FFT // 2
    padded = jnp.pad(feat, ((0, 0), (pad, pad)), mode="reflect")

    # Hop-sized chunks only -- the 2.5x overlapped frame expansion happens on-chip,
    # so per-frame HBM traffic is just 160 bf16 samples in + 128 f32 coeffs out.
    target = (f_pad + 2) * HOP
    cur = padded.shape[1]
    if cur < target:
        padded = jnp.pad(padded, ((0, 0), (0, target - cur)))
    else:
        padded = padded[:, :target]
    chunks = padded.reshape(B, f_pad + 2, HOP).astype(jnp.bfloat16)   # (B, f_pad+2, 160)

    dft_m = jnp.asarray(dft_basis_padded(), dtype=jnp.bfloat16)   # (400, 512)
    mel_m = jnp.asarray(mel_basis_padded(), dtype=jnp.bfloat16)   # (256, 128)
    dct_m = jnp.asarray(dct_matrix_padded(), dtype=jnp.bfloat16)  # (128, 128) bf16 DCT

    kernel = functools.partial(mfcc_kernel, n_valid_frames=n_frames)

    out = pl.pallas_call(
        kernel,
        out_shape=jax.ShapeDtypeStruct((B, f_pad, N_MFCC_PAD), jnp.float32),
        grid=(B,),
        in_specs=[
            pl.BlockSpec((1, f_pad + 2, HOP), lambda b: (b, 0, 0)),
            pl.BlockSpec((N_FFT, 2 * N_BINS_PAD), lambda b: (0, 0)),
            pl.BlockSpec((N_BINS_PAD, N_MELS), lambda b: (0, 0)),
            pl.BlockSpec((N_MELS, N_MFCC_PAD), lambda b: (0, 0)),
        ],
        out_specs=pl.BlockSpec((1, f_pad, N_MFCC_PAD), lambda b: (b, 0, 0)),
        compiler_params=pltpu.CompilerParams(
            dimension_semantics=("parallel",),
            vmem_limit_bytes=_vmem_limit_bytes(),
        ),
    )(chunks, dft_m, mel_m, dct_m)

    out = out[:, :n_frames, :N_MFCC]             # drop frame / mfcc padding

    if ilens is not None:
        # masked_fill(make_pad_mask(ilens, feat, 1), 0.0) -- glue, plain JAX
        mask = jnp.arange(n_frames)[None, :] < ilens[:, None]
        out = jnp.where(mask[:, :, None], out, 0.0)
        lens = ilens.astype(jnp.int32)
    else:
        lens = jnp.full((B,), n_frames, dtype=jnp.int32)
    return out, lens


if __name__ == "__main__":
    key = jax.random.PRNGKey(0)
    B, T = 2, 1600                         # 0.1 s of 16 kHz audio -> 11 frames
    feat = jax.random.normal(key, (B, T), dtype=jnp.float32)

    mfcc, lens = mfcc_librosa_forward(feat)
    jax.block_until_ready((mfcc, lens))

    assert mfcc.shape == (B, 1 + T // HOP, N_MFCC), mfcc.shape
    assert lens.shape == (B,)
    assert bool(jnp.all(jnp.isfinite(mfcc)))
    print("KERNEL_OK")
</pallas_src>

<mosaic_0001>
module attributes {stable_mosaic.version = 11 : i64} {
  func.func @mfcc_kernel(%arg0: i32, %arg1: memref<1x130x160xbf16, #tpu.memory_space<vmem>>, %arg2: memref<400x512xbf16, #tpu.memory_space<vmem>>, %arg3: memref<256x128xbf16, #tpu.memory_space<vmem>>, %arg4: memref<128x128xbf16, #tpu.memory_space<vmem>>, %arg5: memref<1x128x128xf32, #tpu.memory_space<vmem>>) attributes {dimension_semantics = [#tpu.dimension_semantics<parallel>], iteration_bounds = array<i64: 2>, scalar_prefetch = 0 : i64, scratch_operands = 0 : i64, tpu.core_type = #tpu.core_type<tc>, window_params = [{transform_indices = @transform_0, window_bounds = array<i64: 1, 130, 160>}, {pipeline_mode = #tpu.pipeline_mode<synchronous>, transform_indices = @transform_1, window_bounds = array<i64: 400, 512>}, {pipeline_mode = #tpu.pipeline_mode<synchronous>, transform_indices = @transform_2, window_bounds = array<i64: 256, 128>}, {pipeline_mode = #tpu.pipeline_mode<synchronous>, transform_indices = @transform_3, window_bounds = array<i64: 128, 128>}, {transform_indices = @transform_4, window_bounds = array<i64: 1, 128, 128>}]} {
    %c0 = arith.constant 0 : index
    %c0_0 = arith.constant 0 : index
    %c0_1 = arith.constant 0 : index
    %0 = vector.load %arg1[%c0, %c0_0, %c0_1] : memref<1x130x160xbf16, #tpu.memory_space<vmem>>, vector<1x130x160xbf16>
    %1 = vector.shape_cast %0 : vector<1x130x160xbf16> to vector<130x160xbf16>
    %2 = arith.extf %1 : vector<130x160xbf16> to vector<130x160xf32>
    %c0_2 = arith.constant 0 : index
    %c0_3 = arith.constant 0 : index
    %3 = vector.load %arg2[%c0_2, %c0_3] : memref<400x512xbf16, #tpu.memory_space<vmem>>, vector<400x512xbf16>
    %4 = vector.extract_strided_slice %2 {offsets = [0, 0], sizes = [128, 160], strides = [1, 1]} : vector<130x160xf32> to vector<128x160xf32>
    %5 = arith.truncf %4 : vector<128x160xf32> to vector<128x160xbf16>
    %6 = vector.extract_strided_slice %2 {offsets = [1, 0], sizes = [128, 160], strides = [1, 1]} : vector<130x160xf32> to vector<128x160xf32>
    %7 = arith.truncf %6 : vector<128x160xf32> to vector<128x160xbf16>
    %8 = vector.extract_strided_slice %2 {offsets = [2, 0], sizes = [128, 80], strides = [1, 1]} : vector<130x160xf32> to vector<128x80xf32>
    %9 = arith.truncf %8 : vector<128x80xf32> to vector<128x80xbf16>
    %10 = vector.extract_strided_slice %3 {offsets = [0, 0], sizes = [160, 512], strides = [1, 1]} : vector<400x512xbf16> to vector<160x512xbf16>
    %cst = arith.constant dense<0.000000e+00> : vector<128x512xf32>
    %11 = tpu.matmul %5, %10, %cst {dimension_numbers = #tpu.dot_dimension_numbers<[1], [0], [0], [1], [0, 0, 1, 1], [], []>} : vector<128x160xbf16>, vector<160x512xbf16>, vector<128x512xf32> -> vector<128x512xf32>
    %12 = vector.extract_strided_slice %3 {offsets = [160, 0], sizes = [160, 512], strides = [1, 1]} : vector<400x512xbf16> to vector<160x512xbf16>
    %cst_4 = arith.constant dense<0.000000e+00> : vector<128x512xf32>
    %13 = tpu.matmul %7, %12, %cst_4 {dimension_numbers = #tpu.dot_dimension_numbers<[1], [0], [0], [1], [0, 0, 1, 1], [], []>} : vector<128x160xbf16>, vector<160x512xbf16>, vector<128x512xf32> -> vector<128x512xf32>
    %14 = arith.addf %11, %13 : vector<128x512xf32>
    %15 = vector.extract_strided_slice %3 {offsets = [320, 0], sizes = [80, 512], strides = [1, 1]} : vector<400x512xbf16> to vector<80x512xbf16>
    %cst_5 = arith.constant dense<0.000000e+00> : vector<128x512xf32>
    %16 = tpu.matmul %9, %15, %cst_5 {dimension_numbers = #tpu.dot_dimension_numbers<[1], [0], [0], [1], [0, 0, 1, 1], [], []>} : vector<128x80xbf16>, vector<80x512xbf16>, vector<128x512xf32> -> vector<128x512xf32>
    %17 = arith.addf %14, %16 : vector<128x512xf32>
    %18 = vector.extract_strided_slice %17 {offsets = [0, 0], sizes = [128, 256], strides = [1, 1]} : vector<128x512xf32> to vector<128x256xf32>
    %19 = vector.extract_strided_slice %17 {offsets = [0, 256], sizes = [128, 256], strides = [1, 1]} : vector<128x512xf32> to vector<128x256xf32>
    %20 = arith.mulf %18, %18 : vector<128x256xf32>
    %21 = arith.mulf %19, %19 : vector<128x256xf32>
    %22 = arith.addf %20, %21 : vector<128x256xf32>
    %23 = arith.truncf %22 : vector<128x256xf32> to vector<128x256xbf16>
    %c0_6 = arith.constant 0 : index
    %c0_7 = arith.constant 0 : index
    %24 = vector.load %arg3[%c0_6, %c0_7] : memref<256x128xbf16, #tpu.memory_space<vmem>>, vector<256x128xbf16>
    %cst_8 = arith.constant dense<0.000000e+00> : vector<128x128xf32>
    %25 = tpu.matmul %23, %24, %cst_8 {dimension_numbers = #tpu.dot_dimension_numbers<[1], [0], [0], [1], [0, 0, 1, 1], [], []>} : vector<128x256xbf16>, vector<256x128xbf16>, vector<128x128xf32> -> vector<128x128xf32>
    %26 = tpu.iota {dimensions = array<i32: 0>} : vector<128x128xi32>
    %c11_i32 = arith.constant 11 : i32
    %27 = vector.broadcast %c11_i32 : i32 to vector<128x128xi32>
    %28 = arith.cmpi slt, %26, %27 : vector<128x128xi32>
    %cst_9 = arith.constant 0.000000e+00 : f32
    %29 = vector.broadcast %cst_9 : f32 to vector<128x128xf32>
    %30 = arith.select %28, %25, %29 : vector<128x128xi1>, vector<128x128xf32>
    %31 = vector.shape_cast %30 : vector<128x128xf32> to vector<1x128x128xf32>
    %cst_10 = arith.constant dense<0xFF800000> : vector<1xf32>
    %32 = vector.multi_reduction <maximumf>, %31, %cst_10 [1, 2] : vector<1x128x128xf32> to vector<1xf32>
    %33 = vector.shape_cast %32 : vector<1xf32> to vector<1x1x1xf32>
    %34 = vector.extract %33[0, 0, 0] : f32 from vector<1x1x1xf32>
    %cst_11 = arith.constant 9.99999993E-9 : f32
    %35 = arith.mulf %34, %cst_11 : f32
    %cst_12 = arith.constant 1.000000e-10 : f32
    %36 = arith.maximumf %cst_12, %35 : f32
    %37 = vector.broadcast %36 : f32 to vector<128x128xf32>
    %38 = arith.maximumf %25, %37 : vector<128x128xf32>
    %39 = math.log %38 : vector<128x128xf32>
    %cst_13 = arith.constant 4.34294462 : f32
    %40 = vector.broadcast %cst_13 : f32 to vector<128x128xf32>
    %41 = arith.mulf %40, %39 : vector<128x128xf32>
    %42 = arith.truncf %41 : vector<128x128xf32> to vector<128x128xbf16>
    %c0_14 = arith.constant 0 : index
    %c0_15 = arith.constant 0 : index
    %43 = vector.load %arg4[%c0_14, %c0_15] : memref<128x128xbf16, #tpu.memory_space<vmem>>, vector<128x128xbf16>
    %cst_16 = arith.constant dense<0.000000e+00> : vector<128x128xf32>
    %44 = tpu.matmul %42, %43, %cst_16 {dimension_numbers = #tpu.dot_dimension_numbers<[1], [0], [0], [1], [0, 0, 1, 1], [], []>} : vector<128x128xbf16>, vector<128x128xbf16>, vector<128x128xf32> -> vector<128x128xf32>
    %c0_17 = arith.constant 0 : index
    %c0_18 = arith.constant 0 : index
    %c0_19 = arith.constant 0 : index
    %45 = vector.load %arg5[%c0_17, %c0_18, %c0_19] : memref<1x128x128xf32, #tpu.memory_space<vmem>>, vector<1x128x128xf32>
    %46 = vector.shape_cast %45 : vector<1x128x128xf32> to vector<128x128xf32>
    %47 = vector.shape_cast %44 : vector<128x128xf32> to vector<1x128x128xf32>
    tpu.vector_store %arg5[%c0_17, %c0_18, %c0_19], %47 {strides = array<i32>} : memref<1x128x128xf32, #tpu.memory_space<vmem>>, vector<1x128x128xf32>,
    return
  }
  func.func @transform_0(%arg0: i32) -> (i32, i32, i32) {
    %c0_i32 = arith.constant 0 : i32
    %c0_i32_0 = arith.constant 0 : i32
    %c0_i32_1 = arith.constant 0 : i32
    return %arg0, %c0_i32, %c0_i32_0 : i32, i32, i32
  }
  func.func @transform_1(%arg0: i32) -> (i32, i32) {
    %c0_i32 = arith.constant 0 : i32
    %c0_i32_0 = arith.constant 0 : i32
    %c0_i32_1 = arith.constant 0 : i32
    return %c0_i32, %c0_i32_0 : i32, i32
  }
  func.func @transform_2(%arg0: i32) -> (i32, i32) {
    %c0_i32 = arith.constant 0 : i32
    %c0_i32_0 = arith.constant 0 : i32
    %c0_i32_1 = arith.constant 0 : i32
    return %c0_i32, %c0_i32_0 : i32, i32
  }
  func.func @transform_3(%arg0: i32) -> (i32, i32) {
    %c0_i32 = arith.constant 0 : i32
    %c0_i32_0 = arith.constant 0 : i32
    %c0_i32_1 = arith.constant 0 : i32
    return %c0_i32, %c0_i32_0 : i32, i32
  }
  func.func @transform_4(%arg0: i32) -> (i32, i32, i32) {
    %c0_i32 = arith.constant 0 : i32
    %c0_i32_0 = arith.constant 0 : i32
    %c0_i32_1 = arith.constant 0 : i32
    return %arg0, %c0_i32, %c0_i32_0 : i32, i32, i32
  }
}

</mosaic_0001>

<llo_original>
// kernel: tpu_custom_call.1
$region0: #{tpu_custom_call.1}
  #allocation0 [shape = 'u32[]', space=smem, size = 0x4, offset = 0x4, fixed_abs, tag = 'smem constant byte address 0x4 - core index']
  #allocation1 [shape = 'u32[144,128]{1,0:T(1,128)}', space=vmem, size = 0x12000, scoped, tag = 'internal scratch']
  %s0 = inlined_call_operand.vmem [shape: bf16[2,130,160], index: 0, kind: input, shape index: {}]
  %s1 = inlined_call_operand.hbm [shape: bf16[400,512], index: 1, kind: input, shape index: {}]
  %s2 = inlined_call_operand.vmem [shape: bf16[256,128], index: 2, kind: input, shape index: {}]
  %s3 = inlined_call_operand.vmem [shape: bf16[128,128], index: 3, kind: input, shape index: {}]
  %s4 = inlined_call_operand.hbm [shape: f32[2,128,128], index: 4, kind: output, shape index: {}]
  %s5 = sld [smem:[#allocation0]]
  $region53: #{tpu_custom_call.1} parent=0
    _
  %s7 = ssub.s32 1, %s5
  %s8 = scalar_select 0, %s7, %s5
  $region1: #{tpu_custom_call.1} parent=0
    #allocation2 [shape = 'u8[409600]{0}', space=vmem, size = 0x64000, scoped, tag = 'input window, operand 1, single buffered']
    #allocation3 [shape = 's32[2]{0}', space=sflag, size = 0x8, scoped, tag = 'scoped memory for tpu_custom_call.1']
    #allocation4 [shape = 's32[2]{0}', space=sflag, size = 0x8, scoped, tag = 'scoped memory for tpu_custom_call.1']
    #allocation5 [shape = 'u8[131072]{0}', space=vmem, size = 0x20000, scoped, tag = 'output window, operand 0']
    %9 = vsyncpa [#allocation3], 0
    %10 = vsyncpa [#allocation4], 0
    %s11 = scalar_lea.sflag [#allocation4], 1
    %12 = vsyncpa %s11, 0
    loop: start=0, step=1, limit=4
    $region2: #{tpu_custom_call.1} parent=1 // loop_pre_header
      _
    $region3: #{tpu_custom_call.1} parent=1 // loop_header
      %s14 = sphi 0, %s18
      %p15 = scmp.ge.s32.totalorder %s14, 4
      %s24 = sphi 0, %s26
      %s27 = sphi 0, %s24
      %s28 = sphi 0, %s27
      %s44 = sphi 0, %s28
      %s48 = sphi 0, %s48
      %s50 = sphi 0, %s48
      %s51 = sphi 0, %s50
      %s65 = sphi 0, %s51
      %s69 = sphi 0, %s69
      %s71 = sphi 0, %s69
      %s72 = sphi 0, %s71
      %s86 = sphi 0, %s72
      %s90 = sphi 0, %s90
      %s92 = sphi 0, %s90
      %s93 = sphi 0, %s92
      %s107 = sphi 0, %s93
      %s113 = sphi 0, %s115
      %s116 = sphi 0, %s113
      %s117 = sphi 0, %s116
      %s133 = sphi 0, %s117
    $region4: #{tpu_custom_call.1} parent=1 // loop_header_branch
      %17 = sbr.rel (%p15) target = $region8
    $region5: #{tpu_custom_call.1} parent=1 // loop_body
      %s19 = ssub.s32 %s14, 1
      %s20 = ssub.s32 %s14, 2
      %s21 = sadd.s32 %s14, 1
      %s22 = ssub.s32 %s14, %s21
      %p23 = scmp.eq.s32.totalorder %s22, 0
      %s25 = sadd.s32 %s24, 1
      %s26 = scalar_select %p23, %s24, %s25
      %p29 = pneg %p23
      %p30 = scmp.eq.s32.totalorder %s14, 1
      %p31 = por %p29, %p30
      %p32 = scmp.ne.s32.totalorder %s24, %s27
      %p33 = scmp.eq.s32.totalorder %s14, 0
      %p34 = por %p32, %p33
      %p35 = scmp.ne.s32.totalorder %s24, %s27
      %p36 = scmp.eq.s32.totalorder %s19, 1
      %p37 = por %p35, %p36
      %p38 = scmp.ne.s32.totalorder %s27, %s28
      %p39 = scmp.eq.s32.totalorder %s19, 0
      %p40 = por %p38, %p39
      %p41 = scmp.ne.s32.totalorder %s27, %s28
      %p42 = scmp.eq.s32.totalorder %s20, 1
      %p43 = por %p41, %p42
      %p45 = scmp.ne.s32.totalorder %s28, %s44
      %p46 = scmp.eq.s32.totalorder %s20, 0
      %p47 = por %p45, %p46
      %s49 = sadd.s32 %s48, 1
      %p52 = scmp.eq.s32.totalorder %s14, 1
      %p53 = scmp.ne.s32.totalorder %s48, %s50
      %p54 = scmp.eq.s32.totalorder %s14, 0
      %p55 = por %p53, %p54
      %p56 = scmp.ne.s32.totalorder %s48, %s50
      %p57 = scmp.eq.s32.totalorder %s19, 1
      %p58 = por %p56, %p57
      %p59 = scmp.ne.s32.totalorder %s50, %s51
      %p60 = scmp.eq.s32.totalorder %s19, 0
      %p61 = por %p59, %p60
      %p62 = scmp.ne.s32.totalorder %s50, %s51
      %p63 = scmp.eq.s32.totalorder %s20, 1
      %p64 = por %p62, %p63
      %p66 = scmp.ne.s32.totalorder %s51, %s65
      %p67 = scmp.eq.s32.totalorder %s20, 0
      %p68 = por %p66, %p67
      %s70 = sadd.s32 %s69, 1
      %p73 = scmp.eq.s32.totalorder %s14, 1
      %p74 = scmp.ne.s32.totalorder %s69, %s71
      %p75 = scmp.eq.s32.totalorder %s14, 0
      %p76 = por %p74, %p75
      %p77 = scmp.ne.s32.totalorder %s69, %s71
      %p78 = scmp.eq.s32.totalorder %s19, 1
      %p79 = por %p77, %p78
      %p80 = scmp.ne.s32.totalorder %s71, %s72
      %p81 = scmp.eq.s32.totalorder %s19, 0
      %p82 = por %p80, %p81
      %p83 = scmp.ne.s32.totalorder %s71, %s72
      %p84 = scmp.eq.s32.totalorder %s20, 1
      %p85 = por %p83, %p84
      %p87 = scmp.ne.s32.totalorder %s72, %s86
      %p88 = scmp.eq.s32.totalorder %s20, 0
      %p89 = por %p87, %p88
      %s91 = sadd.s32 %s90, 1
      %p94 = scmp.eq.s32.totalorder %s14, 1
      %p95 = scmp.ne.s32.totalorder %s90, %s92
      %p96 = scmp.eq.s32.totalorder %s14, 0
      %p97 = por %p95, %p96
      %p98 = scmp.ne.s32.totalorder %s90, %s92
      %p99 = scmp.eq.s32.totalorder %s19, 1
      %p100 = por %p98, %p99
      %p101 = scmp.ne.s32.totalorder %s92, %s93
      %p102 = scmp.eq.s32.totalorder %s19, 0
      %p103 = por %p101, %p102
      %p104 = scmp.ne.s32.totalorder %s92, %s93
      %p105 = scmp.eq.s32.totalorder %s20, 1
      %p106 = por %p104, %p105
      %p108 = scmp.ne.s32.totalorder %s93, %s107
      %p109 = scmp.eq.s32.totalorder %s20, 0
      %p110 = por %p108, %p109
      %s111 = ssub.s32 %s14, %s21
      %p112 = scmp.eq.s32.totalorder %s111, 0
      %s114 = sadd.s32 %s113, 1
      %s115 = scalar_select %p112, %s113, %s114
      %p118 = pneg %p112
      %p119 = scmp.eq.s32.totalorder %s14, 1
      %p120 = por %p118, %p119
      %p121 = scmp.ne.s32.totalorder %s113, %s116
      %p122 = scmp.eq.s32.totalorder %s14, 0
      %p123 = por %p121, %p122
      %p124 = scmp.ne.s32.totalorder %s113, %s116
      %p125 = scmp.eq.s32.totalorder %s19, 1
      %p126 = por %p124, %p125
      %p127 = scmp.ne.s32.totalorder %s116, %s117
      %p128 = scmp.eq.s32.totalorder %s19, 0
      %p129 = por %p127, %p128
      %p130 = scmp.ne.s32.totalorder %s116, %s117
      %p131 = scmp.eq.s32.totalorder %s20, 1
      %p132 = por %p130, %p131
      %p134 = scmp.ne.s32.totalorder %s117, %s133
      %p135 = scmp.eq.s32.totalorder %s20, 0
      %p136 = por %p134, %p135
      %p137 = scmp.le.s32.totalorder 1, %s14
      %p138 = scmp.lt.s32.totalorder %s14, 3
      %p139 = pnand %p137, %p138
      %p140 = pneg %p139
      // Predicated region
      $region9: #{tpu_custom_call.1} parent=5 // pred_check
        _
      $region10: #{tpu_custom_call.1} parent=5 // pred_check_branch
        %142 = sbr.rel (%p139) target = $region12
      $region11: #{tpu_custom_call.1} parent=5 // pred_region
        %s143 = ssub.s32 %s14, 1
        // Predicated region
        $region13: #{tpu_custom_call.1} parent=11 // pred_check
          %p144 = pneg %p61
        $region14: #{tpu_custom_call.1} parent=11 // pred_check_branch
          %146 = sbr.rel (%p144) target = $region16
        $region15: #{tpu_custom_call.1} parent=11 // pred_region
          %s148 = ssub.s32 12800, 12800
          %149 = vsyncadd [#allocation3], %s148
          %s150 = sshll.u32 [#allocation2], 4
          %s151 = int_to_ptr.vmem [resolvable:$true] %s150
          %156 = dma.hbm_to_vmem [thread:$0]  %s1, 12800, %s151, [#allocation3], 256, 256, 16
        $region16: #{tpu_custom_call.1} parent=11 // pred_fallthru
          _
        // Predicated region
        $region17: #{tpu_custom_call.1} parent=11 // pred_check
          %p157 = pneg %p82
        $region18: #{tpu_custom_call.1} parent=11 // pred_check_branch
          %159 = sbr.rel (%p157) target = $region20
        $region19: #{tpu_custom_call.1} parent=11 // pred_region
          _
        $region20: #{tpu_custom_call.1} parent=11 // pred_fallthru
          _
        // Predicated region
        $region21: #{tpu_custom_call.1} parent=11 // pred_check
          %p160 = pneg %p103
        $region22: #{tpu_custom_call.1} parent=11 // pred_check_branch
          %162 = sbr.rel (%p160) target = $region24
        $region23: #{tpu_custom_call.1} parent=11 // pred_region
          _
        $region24: #{tpu_custom_call.1} parent=11 // pred_fallthru
          _
      $region12: #{tpu_custom_call.1} parent=5 // pred_fallthru
        _
      %p163 = scmp.lt.s32.totalorder %s14, 2
      // Predicated region
      $region25: #{tpu_custom_call.1} parent=5 // pred_check
        %p164 = pneg %p163
      $region26: #{tpu_custom_call.1} parent=5 // pred_check_branch
        %166 = sbr.rel (%p164) target = $region28
      $region27: #{tpu_custom_call.1} parent=5 // pred_region
        // Predicated region
        $region29: #{tpu_custom_call.1} parent=27 // pred_check
          %p167 = pneg %p34
        $region30: #{tpu_custom_call.1} parent=27 // pred_check_branch
          %169 = sbr.rel (%p167) target = $region32
        $region31: #{tpu_custom_call.1} parent=27 // pred_region
          %p170 = scmp.lt.s32.totalorder %s14, 1
          %s171 = scalar_select %p170, %s14, 1
          %s172 = smul.addr %s171, 34
          %s173 = smul.addr %s172, 4
          %s174 = scalar_lea.vmem %s0, %s173
        $region32: #{tpu_custom_call.1} parent=27 // pred_fallthru
          _
      $region28: #{tpu_custom_call.1} parent=5 // pred_fallthru
        _
      %p175 = scmp.le.s32.totalorder 1, %s14
      %p176 = scmp.lt.s32.totalorder %s14, 3
      %p177 = pnand %p175, %p176
      %p178 = pneg %p177
      // Predicated region
      $region33: #{tpu_custom_call.1} parent=5 // pred_check
        _
      $region34: #{tpu_custom_call.1} parent=5 // pred_check_branch
        %180 = sbr.rel (%p177) target = $region36
      $region35: #{tpu_custom_call.1} parent=5 // pred_region
        %s181 = ssub.s32 %s14, 1
        // Predicated region
        $region37: #{tpu_custom_call.1} parent=35 // pred_check
          %p182 = pneg %p61
        $region38: #{tpu_custom_call.1} parent=35 // pred_check_branch
          %184 = sbr.rel (%p182) target = $region40
        $region39: #{tpu_custom_call.1} parent=35 // pred_region
          %185 = dma.done [#allocation3], 12800
        $region40: #{tpu_custom_call.1} parent=35 // pred_fallthru
          _
        %p186 = scmp.lt.s32.totalorder %s19, 1
        %s187 = scalar_select %p186, %s19, 1
        %s188 = smul.addr %s187, 34
        %s189 = smul.addr %s188, 4
        %s190 = scalar_lea.vmem %s0, %s189
        %p191 = pneg %p40
        %p192 = pneg %p37
        %p193 = pneg %p61
        %p194 = pneg %p58
        %p195 = pneg %p82
        %p196 = pneg %p79
        %p197 = pneg %p103
        %p198 = pneg %p100
        %p199 = pneg %p129
        %p200 = pneg %p126
        %s201 = sand.u32 %s116, 1
        %s202 = scalar_lea.sflag [#allocation4], %s201
        %s203 = sand.u32 %s116, 1
        %s204 = smul.addr %s203, 128
        %s205 = scalar_lea.vmem [#allocation5], %s204
        %p206 = scmp.lt.s32.totalorder %s19, 1
        %s207 = scalar_select %p206, %s19, 1
        %s208 = smul.addr %s207, 34
        %s209 = smul.addr %s208, 4
        %s210 = scalar_lea.vmem %s0, %s209
        %v212 = vld [vmem:[%s210] sm:$0xff]
        %v213 = vld [vmem:[%s210 + $0x8] sm:$0xff]
        %v214 = vld [vmem:[%s210 + $0x10] sm:$0xff]
        %v215 = vld [vmem:[%s210 + $0x18] sm:$0xff]
        %v216 = vld [vmem:[%s210 + $0x20] sm:$0xff]
        %v217 = vld [vmem:[%s210 + $0x28] sm:$0xff]
        %v218 = vld [vmem:[%s210 + $0x30] sm:$0xff]
        %v219 = vld [vmem:[%s210 + $0x38] sm:$0xff]
        %v220 = vld [vmem:[%s210 + $0x40] sm:$0xff]
        %v221 = vld [vmem:[%s210 + $0x48] sm:$0xff]
        %v222 = vld [vmem:[%s210 + $0x50] sm:$0xff]
        %v223 = vld [vmem:[%s210 + $0x58] sm:$0xff]
        %v224 = vld [vmem:[%s210 + $0x60] sm:$0xff]
        %v225 = vld [vmem:[%s210 + $0x68] sm:$0xff]
        %v226 = vld [vmem:[%s210 + $0x70] sm:$0xff]
        %v227 = vld [vmem:[%s210 + $0x78] sm:$0xff]
        %v228 = vld [vmem:[%s210 + $0x80] sm:$0x11]
        %v229 = vunpack.c.l.bf16 %v212
        %v230 = vunpack.c.h.bf16 %v212
        %v231 = vunpack.c.l.bf16 %v213
        %v232 = vunpack.c.h.bf16 %v213
        %v233 = vunpack.c.l.bf16 %v214
        %v234 = vunpack.c.h.bf16 %v214
        %v235 = vunpack.c.l.bf16 %v215
        %v236 = vunpack.c.h.bf16 %v215
        %v237 = vunpack.c.l.bf16 %v216
        %v238 = vunpack.c.h.bf16 %v216
        %v239 = vunpack.c.l.bf16 %v217
        %v240 = vunpack.c.h.bf16 %v217
        %v241 = vunpack.c.l.bf16 %v218
        %v242 = vunpack.c.h.bf16 %v218
        %v243 = vunpack.c.l.bf16 %v219
        %v244 = vunpack.c.h.bf16 %v219
        %v245 = vunpack.c.l.bf16 %v220
        %v246 = vunpack.c.h.bf16 %v220
        %v247 = vunpack.c.l.bf16 %v221
        %v248 = vunpack.c.h.bf16 %v221
        %v249 = vunpack.c.l.bf16 %v222
        %v250 = vunpack.c.h.bf16 %v222
        %v251 = vunpack.c.l.bf16 %v223
        %v252 = vunpack.c.h.bf16 %v223
        %v253 = vunpack.c.l.bf16 %v224
        %v254 = vunpack.c.h.bf16 %v224
        %v255 = vunpack.c.l.bf16 %v225
        %v256 = vunpack.c.h.bf16 %v225
        %v257 = vunpack.c.l.bf16 %v226
        %v258 = vunpack.c.h.bf16 %v226
        %v259 = vunpack.c.l.bf16 %v227
        %v260 = vunpack.c.h.bf16 %v227
        %v261 = vunpack.c.l.bf16 %v228
        %v262 = vunpack.c.h.bf16 %v228
        %v263 = vld [vmem:[#allocation2] sm:$0xff]
        %v264 = vld [vmem:[#allocation2 + $0x8] sm:$0xff]
        %v265 = vld [vmem:[#allocation2 + $0x10] sm:$0xff]
        %v266 = vld [vmem:[#allocation2 + $0x18] sm:$0xff]
        %v267 = vld [vmem:[#allocation2 + $0x20] sm:$0xff]
        %v268 = vld [vmem:[#allocation2 + $0x28] sm:$0xff]
        %v269 = vld [vmem:[#allocation2 + $0x30] sm:$0xff]
        %v270 = vld [vmem:[#allocation2 + $0x38] sm:$0xff]
        %v271 = vld [vmem:[#allocation2 + $0x40] sm:$0xff]
        %v272 = vld [vmem:[#allocation2 + $0x48] sm:$0xff]
        %v273 = vld [vmem:[#allocation2 + $0x50] sm:$0xff]
        %v274 = vld [vmem:[#allocation2 + $0x58] sm:$0xff]
        %v275 = vld [vmem:[#allocation2 + $0x60] sm:$0xff]
        %v276 = vld [vmem:[#allocation2 + $0x68] sm:$0xff]
        %v277 = vld [vmem:[#allocation2 + $0x70] sm:$0xff]
        %v278 = vld [vmem:[#allocation2 + $0x78] sm:$0xff]
        %v279 = vld [vmem:[#allocation2 + $0x80] sm:$0xff]
        %v280 = vld [vmem:[#allocation2 + $0x88] sm:$0xff]
        %v281 = vld [vmem:[#allocation2 + $0x90] sm:$0xff]
        %v282 = vld [vmem:[#allocation2 + $0x98] sm:$0xff]
        %v283 = vld [vmem:[#allocation2 + $0xa0] sm:$0xff]
        %v284 = vld [vmem:[#allocation2 + $0xa8] sm:$0xff]
        %v285 = vld [vmem:[#allocation2 + $0xb0] sm:$0xff]
        %v286 = vld [vmem:[#allocation2 + $0xb8] sm:$0xff]
        %v287 = vld [vmem:[#allocation2 + $0xc0] sm:$0xff]
        %v288 = vld [vmem:[#allocation2 + $0xc8] sm:$0xff]
        %v289 = vld [vmem:[#allocation2 + $0xd0] sm:$0xff]
        %v290 = vld [vmem:[#allocation2 + $0xd8] sm:$0xff]
        %v291 = vld [vmem:[#allocation2 + $0xe0] sm:$0xff]
        %v292 = vld [vmem:[#allocation2 + $0xe8] sm:$0xff]
        %v293 = vld [vmem:[#allocation2 + $0xf0] sm:$0xff]
        %v294 = vld [vmem:[#allocation2 + $0xf8] sm:$0xff]
        %v295 = vld [vmem:[#allocation2 + $0x100] sm:$0xff]
        %v296 = vld [vmem:[#allocation2 + $0x108] sm:$0xff]
        %v297 = vld [vmem:[#allocation2 + $0x110] sm:$0xff]
        %v298 = vld [vmem:[#allocation2 + $0x118] sm:$0xff]
        %v299 = vld [vmem:[#allocation2 + $0x120] sm:$0xff]
        %v300 = vld [vmem:[#allocation2 + $0x128] sm:$0xff]
        %v301 = vld [vmem:[#allocation2 + $0x130] sm:$0xff]
        %v302 = vld [vmem:[#allocation2 + $0x138] sm:$0xff]
        %v303 = vld [vmem:[#allocation2 + $0x140] sm:$0xff]
        %v304 = vld [vmem:[#allocation2 + $0x148] sm:$0xff]
        %v305 = vld [vmem:[#allocation2 + $0x150] sm:$0xff]
        %v306 = vld [vmem:[#allocation2 + $0x158] sm:$0xff]
        %v307 = vld [vmem:[#allocation2 + $0x160] sm:$0xff]
        %v308 = vld [vmem:[#allocation2 + $0x168] sm:$0xff]
        %v309 = vld [vmem:[#allocation2 + $0x170] sm:$0xff]
        %v310 = vld [vmem:[#allocation2 + $0x178] sm:$0xff]
        %v311 = vld [vmem:[#allocation2 + $0x180] sm:$0xff]
        %v312 = vld [vmem:[#allocation2 + $0x188] sm:$0xff]
        %v313 = vld [vmem:[#allocation2 + $0x190] sm:$0xff]
        %v314 = vld [vmem:[#allocation2 + $0x198] sm:$0xff]
        %v315 = vld [vmem:[#allocation2 + $0x1a0] sm:$0xff]
        %v316 = vld [vmem:[#allocation2 + $0x1a8] sm:$0xff]
        %v317 = vld [vmem:[#allocation2 + $0x1b0] sm:$0xff]
        %v318 = vld [vmem:[#allocation2 + $0x1b8] sm:$0xff]
        %v319 = vld [vmem:[#allocation2 + $0x1c0] sm:$0xff]
        %v320 = vld [vmem:[#allocation2 + $0x1c8] sm:$0xff]
        %v321 = vld [vmem:[#allocation2 + $0x1d0] sm:$0xff]
        %v322 = vld [vmem:[#allocation2 + $0x1d8] sm:$0xff]
        %v323 = vld [vmem:[#allocation2 + $0x1e0] sm:$0xff]
        %v324 = vld [vmem:[#allocation2 + $0x1e8] sm:$0xff]
        %v325 = vld [vmem:[#allocation2 + $0x1f0] sm:$0xff]
        %v326 = vld [vmem:[#allocation2 + $0x1f8] sm:$0xff]
        %v327 = vld [vmem:[#allocation2 + $0x200] sm:$0xff]
        %v328 = vld [vmem:[#allocation2 + $0x208] sm:$0xff]
        %v329 = vld [vmem:[#allocation2 + $0x210] sm:$0xff]
        %v330 = vld [vmem:[#allocation2 + $0x218] sm:$0xff]
        %v331 = vld [vmem:[#allocation2 + $0x220] sm:$0xff]
        %v332 = vld [vmem:[#allocation2 + $0x228] sm:$0xff]
        %v333 = vld [vmem:[#allocation2 + $0x230] sm:$0xff]
        %v334 = vld [vmem:[#allocation2 + $0x238] sm:$0xff]
        %v335 = vld [vmem:[#allocation2 + $0x240] sm:$0xff]
        %v336 = vld [vmem:[#allocation2 + $0x248] sm:$0xff]
        %v337 = vld [vmem:[#allocation2 + $0x250] sm:$0xff]
        %v338 = vld [vmem:[#allocation2 + $0x258] sm:$0xff]
        %v339 = vld [vmem:[#allocation2 + $0x260] sm:$0xff]
        %v340 = vld [vmem:[#allocation2 + $0x268] sm:$0xff]
        %v341 = vld [vmem:[#allocation2 + $0x270] sm:$0xff]
        %v342 = vld [vmem:[#allocation2 + $0x278] sm:$0xff]
        %v343 = vld [vmem:[#allocation2 + $0x280] sm:$0xff]
        %v344 = vld [vmem:[#allocation2 + $0x288] sm:$0xff]
        %v345 = vld [vmem:[#allocation2 + $0x290] sm:$0xff]
        %v346 = vld [vmem:[#allocation2 + $0x298] sm:$0xff]
        %v347 = vld [vmem:[#allocation2 + $0x2a0] sm:$0xff]
        %v348 = vld [vmem:[#allocation2 + $0x2a8] sm:$0xff]
        %v349 = vld [vmem:[#allocation2 + $0x2b0] sm:$0xff]
        %v350 = vld [vmem:[#allocation2 + $0x2b8] sm:$0xff]
        %v351 = vld [vmem:[#allocation2 + $0x2c0] sm:$0xff]
        %v352 = vld [vmem:[#allocation2 + $0x2c8] sm:$0xff]
        %v353 = vld [vmem:[#allocation2 + $0x2d0] sm:$0xff]
        %v354 = vld [vmem:[#allocation2 + $0x2d8] sm:$0xff]
        %v355 = vld [vmem:[#allocation2 + $0x2e0] sm:$0xff]
        %v356 = vld [vmem:[#allocation2 + $0x2e8] sm:$0xff]
        %v357 = vld [vmem:[#allocation2 + $0x2f0] sm:$0xff]
        %v358 = vld [vmem:[#allocation2 + $0x2f8] sm:$0xff]
        %v359 = vld [vmem:[#allocation2 + $0x300] sm:$0xff]
        %v360 = vld [vmem:[#allocation2 + $0x308] sm:$0xff]
        %v361 = vld [vmem:[#allocation2 + $0x310] sm:$0xff]
        %v362 = vld [vmem:[#allocation2 + $0x318] sm:$0xff]
        %v363 = vpack.c.bf16 %v231, %v229
        %v364 = vpack.c.bf16 %v232, %v230
        %v365 = vpack.c.bf16 %v235, %v233
        %v366 = vpack.c.bf16 %v236, %v234
        %v367 = vpack.c.bf16 %v239, %v237
        %v368 = vpack.c.bf16 %v240, %v238
        %v369 = vpack.c.bf16 %v243, %v241
        %v370 = vpack.c.bf16 %v244, %v242
        %v371 = vpack.c.bf16 %v247, %v245
        %v372 = vpack.c.bf16 %v248, %v246
        %v373 = vpack.c.bf16 %v251, %v249
        %v374 = vpack.c.bf16 %v252, %v250
        %v375 = vpack.c.bf16 %v255, %v253
        %v376 = vpack.c.bf16 %v256, %v254
        %v377 = vpack.c.bf16 %v259, %v257
        %v378 = vpack.c.bf16 %v260, %v258
        %v379 = vpack.c.bf16 %v261, %v261
        %v380 = vpack.c.bf16 %v262, %v262
        %vm381 = vsmask.f32 7424
        %v383 = vshrl.u32 %v363, 16
        %v385 = vshll.u32 %v363, 16
        %v387 = vrot.slane %v385, 1
        %v388 = vor.u32 %v383, %v387
        %v390 = vshll.u32 %v365, 16
        %v392 = vrot.slane %v390, 1
        %v393 = vsel %vm381, %v388, %v392
        %v395 = vshrl.u32 %v364, 16
        %v397 = vshll.u32 %v364, 16
        %v399 = vrot.slane %v397, 1
        %v400 = vor.u32 %v395, %v399
        %v402 = vshll.u32 %v366, 16
        %v404 = vrot.slane %v402, 1
        %v405 = vsel %vm381, %v400, %v404
        %v406 = vshrl.u32 %v365, 16
        %v408 = vor.u32 %v406, %v392
        %v410 = vshll.u32 %v367, 16
        %v412 = vrot.slane %v410, 1
        %v413 = vsel %vm381, %v408, %v412
        %v414 = vshrl.u32 %v366, 16
        %v416 = vor.u32 %v414, %v404
        %v418 = vshll.u32 %v368, 16
        %v420 = vrot.slane %v418, 1
        %v421 = vsel %vm381, %v416, %v420
        %v422 = vshrl.u32 %v367, 16
        %v424 = vor.u32 %v422, %v412
        %v426 = vshll.u32 %v369, 16
        %v428 = vrot.slane %v426, 1
        %v429 = vsel %vm381, %v424, %v428
        %v430 = vshrl.u32 %v368, 16
        %v432 = vor.u32 %v430, %v420
        %v434 = vshll.u32 %v370, 16
        %v436 = vrot.slane %v434, 1
        %v437 = vsel %vm381, %v432, %v436
        %v438 = vshrl.u32 %v369, 16
        %v440 = vor.u32 %v438, %v428
        %v442 = vshll.u32 %v371, 16
        %v444 = vrot.slane %v442, 1
        %v445 = vsel %vm381, %v440, %v444
        %v446 = vshrl.u32 %v370, 16
        %v448 = vor.u32 %v446, %v436
        %v450 = vshll.u32 %v372, 16
        %v452 = vrot.slane %v450, 1
        %v453 = vsel %vm381, %v448, %v452
        %v454 = vshrl.u32 %v371, 16
        %v456 = vor.u32 %v454, %v444
        %v458 = vshll.u32 %v373, 16
        %v460 = vrot.slane %v458, 1
        %v461 = vsel %vm381, %v456, %v460
        %v462 = vshrl.u32 %v372, 16
        %v464 = vor.u32 %v462, %v452
        %v466 = vshll.u32 %v374, 16
        %v468 = vrot.slane %v466, 1
        %v469 = vsel %vm381, %v464, %v468
        %v470 = vshrl.u32 %v373, 16
        %v472 = vor.u32 %v470, %v460
        %v474 = vshll.u32 %v375, 16
        %v476 = vrot.slane %v474, 1
        %v477 = vsel %vm381, %v472, %v476
        %v478 = vshrl.u32 %v374, 16
        %v480 = vor.u32 %v478, %v468
        %v482 = vshll.u32 %v376, 16
        %v484 = vrot.slane %v482, 1
        %v485 = vsel %vm381, %v480, %v484
        %v486 = vshrl.u32 %v375, 16
        %v488 = vor.u32 %v486, %v476
        %v490 = vshll.u32 %v377, 16
        %v492 = vrot.slane %v490, 1
        %v493 = vsel %vm381, %v488, %v492
        %v494 = vshrl.u32 %v376, 16
        %v496 = vor.u32 %v494, %v484
        %v498 = vshll.u32 %v378, 16
        %v500 = vrot.slane %v498, 1
        %v501 = vsel %vm381, %v496, %v500
        %v502 = vshrl.u32 %v377, 16
        %v504 = vor.u32 %v502, %v492
        %v506 = vshll.u32 %v379, 16
        %v508 = vrot.slane %v506, 1
        %v509 = vsel %vm381, %v504, %v508
        %v510 = vshrl.u32 %v378, 16
        %v512 = vor.u32 %v510, %v500
        %v514 = vshll.u32 %v380, 16
        %v516 = vrot.slane %v514, 1
        %v517 = vsel %vm381, %v512, %v516
        %v566 = vunpack.c.l.b16 %v303
        %v567 = vunpack.c.h.b16 %v303
        %v568 = vunpack.c.l.b16 %v304
        %v569 = vunpack.c.h.b16 %v304
        %v570 = vunpack.c.l.b16 %v305
        %v571 = vunpack.c.h.b16 %v305
        %v572 = vunpack.c.l.b16 %v306
        %v573 = vunpack.c.h.b16 %v306
        %v574 = vunpack.c.l.b16 %v307
        %v575 = vunpack.c.h.b16 %v307
        %v576 = vunpack.c.l.b16 %v308
        %v577 = vunpack.c.h.b16 %v308
        %v578 = vunpack.c.l.b16 %v309
        %v579 = vunpack.c.h.b16 %v309
        %v580 = vunpack.c.l.b16 %v310
        %v581 = vunpack.c.h.b16 %v310
        %v582 = vunpack.c.l.b16 %v311
        %v583 = vunpack.c.h.b16 %v311
        %v584 = vunpack.c.l.b16 %v312
        %v585 = vunpack.c.h.b16 %v312
        %v586 = vunpack.c.l.b16 %v313
        %v587 = vunpack.c.h.b16 %v313
        %v588 = vunpack.c.l.b16 %v314
        %v589 = vunpack.c.h.b16 %v314
        %v590 = vunpack.c.l.b16 %v315
        %v591 = vunpack.c.h.b16 %v315
        %v592 = vunpack.c.l.b16 %v316
        %v593 = vunpack.c.h.b16 %v316
        %v594 = vunpack.c.l.b16 %v317
        %v595 = vunpack.c.h.b16 %v317
        %v596 = vunpack.c.l.b16 %v318
        %v597 = vunpack.c.h.b16 %v318
        %v598 = vunpack.c.l.b16 %v319
        %v599 = vunpack.c.h.b16 %v319
        %v600 = vunpack.c.l.b16 %v320
        %v601 = vunpack.c.h.b16 %v320
        %v602 = vunpack.c.l.b16 %v321
        %v603 = vunpack.c.h.b16 %v321
        %v604 = vunpack.c.l.b16 %v322
        %v605 = vunpack.c.h.b16 %v322
        %v606 = vunpack.c.l.b16 %v323
        %v607 = vunpack.c.h.b16 %v323
        %v608 = vunpack.c.l.b16 %v324
        %v609 = vunpack.c.h.b16 %v324
        %v610 = vunpack.c.l.b16 %v325
        %v611 = vunpack.c.h.b16 %v325
        %v612 = vunpack.c.l.b16 %v326
        %v613 = vunpack.c.h.b16 %v326
        %v614 = vunpack.c.l.b16 %v327
        %v615 = vunpack.c.h.b16 %v327
        %v616 = vunpack.c.l.b16 %v328
        %v617 = vunpack.c.h.b16 %v328
        %v618 = vunpack.c.l.b16 %v329
        %v619 = vunpack.c.h.b16 %v329
        %v620 = vunpack.c.l.b16 %v330
        %v621 = vunpack.c.h.b16 %v330
        %v622 = vunpack.c.l.b16 %v331
        %v623 = vunpack.c.h.b16 %v331
        %v624 = vunpack.c.l.b16 %v332
        %v625 = vunpack.c.h.b16 %v332
        %v626 = vunpack.c.l.b16 %v333
        %v627 = vunpack.c.h.b16 %v333
        %v628 = vunpack.c.l.b16 %v334
        %v629 = vunpack.c.h.b16 %v334
        %v630 = vunpack.c.l.b16 %v335
        %v631 = vunpack.c.h.b16 %v335
        %v632 = vunpack.c.l.b16 %v336
        %v633 = vunpack.c.h.b16 %v336
        %v634 = vunpack.c.l.b16 %v337
        %v635 = vunpack.c.h.b16 %v337
        %v636 = vunpack.c.l.b16 %v338
        %v637 = vunpack.c.h.b16 %v338
        %v638 = vunpack.c.l.b16 %v339
        %v639 = vunpack.c.h.b16 %v339
        %v640 = vunpack.c.l.b16 %v340
        %v641 = vunpack.c.h.b16 %v340
        %v642 = vunpack.c.l.b16 %v341
        %v643 = vunpack.c.h.b16 %v341
        %v644 = vunpack.c.l.b16 %v342
        %v645 = vunpack.c.h.b16 %v342
        %v646 = vpack.c.b16 %v570, %v566
        %v647 = vpack.c.b16 %v571, %v567
        %v648 = vpack.c.b16 %v572, %v568
        %v649 = vpack.c.b16 %v573, %v569
        %v650 = vpack.c.b16 %v578, %v574
        %v651 = vpack.c.b16 %v579, %v575
        %v652 = vpack.c.b16 %v580, %v576
        %v653 = vpack.c.b16 %v581, %v577
        %v654 = vpack.c.b16 %v586, %v582
        %v655 = vpack.c.b16 %v587, %v583
        %v656 = vpack.c.b16 %v588, %v584
        %v657 = vpack.c.b16 %v589, %v585
        %v658 = vpack.c.b16 %v594, %v590
        %v659 = vpack.c.b16 %v595, %v591
        %v660 = vpack.c.b16 %v596, %v592
        %v661 = vpack.c.b16 %v597, %v593
        %v662 = vpack.c.b16 %v602, %v598
        %v663 = vpack.c.b16 %v603, %v599
        %v664 = vpack.c.b16 %v604, %v600
        %v665 = vpack.c.b16 %v605, %v601
        %v666 = vpack.c.b16 %v610, %v606
        %v667 = vpack.c.b16 %v611, %v607
        %v668 = vpack.c.b16 %v612, %v608
        %v669 = vpack.c.b16 %v613, %v609
        %v670 = vpack.c.b16 %v618, %v614
        %v671 = vpack.c.b16 %v619, %v615
        %v672 = vpack.c.b16 %v620, %v616
        %v673 = vpack.c.b16 %v621, %v617
        %v674 = vpack.c.b16 %v626, %v622
        %v675 = vpack.c.b16 %v627, %v623
        %v676 = vpack.c.b16 %v628, %v624
        %v677 = vpack.c.b16 %v629, %v625
        %v678 = vpack.c.b16 %v634, %v630
        %v679 = vpack.c.b16 %v635, %v631
        %v680 = vpack.c.b16 %v636, %v632
        %v681 = vpack.c.b16 %v637, %v633
        %v682 = vpack.c.b16 %v642, %v638
        %v683 = vpack.c.b16 %v643, %v639
        %v684 = vpack.c.b16 %v644, %v640
        %v685 = vpack.c.b16 %v645, %v641
        %vm726 = vcmask 261120
        %v728 = vsel %vm726, %v405, 0
        %v731 = vsel %vm726, %v421, 0
        %v734 = vsel %vm726, %v437, 0
        %v737 = vsel %vm726, %v453, 0
        %v740 = vsel %vm726, %v469, 0
        %v743 = vsel %vm726, %v485, 0
        %v746 = vsel %vm726, %v501, 0
        %v749 = vsel %vm726, %v517, 0
        %751 = vmatprep.subr.bf16.mxu0 %v647
        %752 = vmatpush1.bf16.msra.mxu0 %v646
        %753 = vmatprep.subr.bf16.mxu0 %v651
        %754 = vmatpush1.bf16.msra.mxu0 %v650
        %755 = vmatprep.subr.bf16.mxu0 %v655
        %756 = vmatpush1.bf16.msra.mxu0 %v654
        %757 = vmatprep.subr.bf16.mxu0 %v659
        %758 = vmatpush1.bf16.msra.mxu0 %v658
        %759 = vmatprep.subr.bf16.mxu0 %v663
        %760 = vmatpush1.bf16.msra.mxu0 %v662
        %761 = vmatprep.subr.bf16.mxu0 %v667
        %762 = vmatpush1.bf16.msra.mxu0 %v666
        %763 = vmatprep.subr.bf16.mxu0 %v671
        %764 = vmatpush1.bf16.msra.mxu0 %v670
        %765 = vmatprep.subr.bf16.mxu0 %v675
        %766 = vmatpush1.bf16.msra.mxu0 %v674
        %767 = vmatprep.subr.bf16.mxu0 %v679
        %768 = vmatpush1.bf16.msra.mxu0 %v678
        %769 = vmatprep.subr.bf16.mxu0 %v683
        %770 = vmatpush1.bf16.msra.mxu0 %v682
        %771 = vmatprep.subr.bf16.mxu0 0
        %772 = vmatpush1.bf16.msra.mxu0 0
        %773 = vmatprep.subr.bf16.mxu0 0
        %774 = vmatpush1.bf16.msra.mxu0 0
        %775 = vmatprep.subr.bf16.mxu0 0
        %776 = vmatpush1.bf16.msra.mxu0 0
        %777 = vmatprep.subr.bf16.mxu0 0
        %778 = vmatpush1.bf16.msra.mxu0 0
        %779 = vmatprep.subr.bf16.mxu0 0
        %780 = vmatpush1.bf16.msra.mxu0 0
        %781 = vmatprep.subr.bf16.mxu0 0
        %782 = vmatpush1.bf16.msra.mxu0 0
        %783 = vmatprep.mubr.bf16.mxu0 %v728
        %784 = vmatmul.mubr.bf16.gmra.mrb[0].mxu0 %v393
        %v785 = vpop.f32.mrb[0].mxu0
        %v786 = vadd.f32 0.0, %v785
        %v787 = vpop.f32.mrb[0].mxu0
        %v788 = vadd.f32 0.0, %v787
        %v789 = vpop.f32.mrb[0].mxu0
        %v790 = vadd.f32 0.0, %v789
        %v791 = vpop.f32.mrb[0].mxu0
        %v792 = vadd.f32 0.0, %v791
        %793 = vmatprep.mubr.bf16.mxu0 %v731
        %794 = vmatmul.mubr.bf16.gmra.mrb[0].mxu0 %v413
        %v795 = vpop.f32.mrb[0].mxu0
        %v796 = vadd.f32 0.0, %v795
        %v797 = vpop.f32.mrb[0].mxu0
        %v798 = vadd.f32 0.0, %v797
        %v799 = vpop.f32.mrb[0].mxu0
        %v800 = vadd.f32 0.0, %v799
        %v801 = vpop.f32.mrb[0].mxu0
        %v802 = vadd.f32 0.0, %v801
        %803 = vmatprep.mubr.bf16.mxu0 %v734
        %804 = vmatmul.mubr.bf16.gmra.mrb[0].mxu0 %v429
        %v805 = vpop.f32.mrb[0].mxu0
        %v806 = vadd.f32 0.0, %v805
        %v807 = vpop.f32.mrb[0].mxu0
        %v808 = vadd.f32 0.0, %v807
        %v809 = vpop.f32.mrb[0].mxu0
        %v810 = vadd.f32 0.0, %v809
        %v811 = vpop.f32.mrb[0].mxu0
        %v812 = vadd.f32 0.0, %v811
        %813 = vmatprep.mubr.bf16.mxu0 %v737
        %814 = vmatmul.mubr.bf16.gmra.mrb[0].mxu0 %v445
        %v815 = vpop.f32.mrb[0].mxu0
        %v816 = vadd.f32 0.0, %v815
        %v817 = vpop.f32.mrb[0].mxu0
        %v818 = vadd.f32 0.0, %v817
        %v819 = vpop.f32.mrb[0].mxu0
        %v820 = vadd.f32 0.0, %v819
        %v821 = vpop.f32.mrb[0].mxu0
        %v822 = vadd.f32 0.0, %v821
        %823 = vmatprep.mubr.bf16.mxu0 %v740
        %824 = vmatmul.mubr.bf16.gmra.mrb[0].mxu0 %v461
        %v825 = vpop.f32.mrb[0].mxu0
        %v826 = vadd.f32 0.0, %v825
        %v827 = vpop.f32.mrb[0].mxu0
        %v828 = vadd.f32 0.0, %v827
        %v829 = vpop.f32.mrb[0].mxu0
        %v830 = vadd.f32 0.0, %v829
        %v831 = vpop.f32.mrb[0].mxu0
        %v832 = vadd.f32 0.0, %v831
        %833 = vmatprep.mubr.bf16.mxu0 %v743
        %834 = vmatmul.mubr.bf16.gmra.mrb[0].mxu0 %v477
        %v835 = vpop.f32.mrb[0].mxu0
        %v836 = vadd.f32 0.0, %v835
        %v837 = vpop.f32.mrb[0].mxu0
        %v838 = vadd.f32 0.0, %v837
        %v839 = vpop.f32.mrb[0].mxu0
        %v840 = vadd.f32 0.0, %v839
        %v841 = vpop.f32.mrb[0].mxu0
        %v842 = vadd.f32 0.0, %v841
        %843 = vmatprep.mubr.bf16.mxu0 %v746
        %844 = vmatmul.mubr.bf16.gmra.mrb[0].mxu0 %v493
        %v845 = vpop.f32.mrb[0].mxu0
        %v846 = vadd.f32 0.0, %v845
        %v847 = vpop.f32.mrb[0].mxu0
        %v848 = vadd.f32 0.0, %v847
        %v849 = vpop.f32.mrb[0].mxu0
        %v850 = vadd.f32 0.0, %v849
        %v851 = vpop.f32.mrb[0].mxu0
        %v852 = vadd.f32 0.0, %v851
        %853 = vmatprep.mubr.bf16.mxu0 %v749
        %854 = vmatmul.mubr.bf16.gmra.mrb[0].mxu0 %v509
        %v855 = vpop.f32.mrb[0].mxu0
        %v856 = vadd.f32 0.0, %v855
        %v857 = vpop.f32.mrb[0].mxu0
        %v858 = vadd.f32 0.0, %v857
        %v859 = vpop.f32.mrb[0].mxu0
        %v860 = vadd.f32 0.0, %v859
        %v861 = vpop.f32.mrb[0].mxu0
        %v862 = vadd.f32 0.0, %v861
        %863 = vdwg.mxu0
        %864 = vmatprep.subr.bf16.mxu0 %v649
        %865 = vmatpush1.bf16.msra.mxu0 %v648
        %866 = vmatprep.subr.bf16.mxu0 %v653
        %867 = vmatpush1.bf16.msra.mxu0 %v652
        %868 = vmatprep.subr.bf16.mxu0 %v657
        %869 = vmatpush1.bf16.msra.mxu0 %v656
        %870 = vmatprep.subr.bf16.mxu0 %v661
        %871 = vmatpush1.bf16.msra.mxu0 %v660
        %872 = vmatprep.subr.bf16.mxu0 %v665
        %873 = vmatpush1.bf16.msra.mxu0 %v664
        %874 = vmatprep.subr.bf16.mxu0 %v669
        %875 = vmatpush1.bf16.msra.mxu0 %v668
        %876 = vmatprep.subr.bf16.mxu0 %v673
        %877 = vmatpush1.bf16.msra.mxu0 %v672
        %878 = vmatprep.subr.bf16.mxu0 %v677
        %879 = vmatpush1.bf16.msra.mxu0 %v676
        %880 = vmatprep.subr.bf16.mxu0 %v681
        %881 = vmatpush1.bf16.msra.mxu0 %v680
        %882 = vmatprep.subr.bf16.mxu0 %v685
        %883 = vmatpush1.bf16.msra.mxu0 %v684
        %884 = vmatprep.subr.bf16.mxu0 0
        %885 = vmatpush1.bf16.msra.mxu0 0
        %886 = vmatprep.subr.bf16.mxu0 0
        %887 = vmatpush1.bf16.msra.mxu0 0
        %888 = vmatprep.subr.bf16.mxu0 0
        %889 = vmatpush1.bf16.msra.mxu0 0
        %890 = vmatprep.subr.bf16.mxu0 0
        %891 = vmatpush1.bf16.msra.mxu0 0
        %892 = vmatprep.subr.bf16.mxu0 0
        %893 = vmatpush1.bf16.msra.mxu0 0
        %894 = vmatprep.subr.bf16.mxu0 0
        %895 = vmatpush1.bf16.msra.mxu0 0
        %896 = vmatprep.mubr.bf16.mxu0 %v728
        %897 = vmatmul.mubr.bf16.gmra.mrb[0].mxu0 %v393
        %v898 = vpop.f32.mrb[0].mxu0
        %v899 = vadd.f32 0.0, %v898
        %v900 = vpop.f32.mrb[0].mxu0
        %v901 = vadd.f32 0.0, %v900
        %v902 = vpop.f32.mrb[0].mxu0
        %v903 = vadd.f32 0.0, %v902
        %v904 = vpop.f32.mrb[0].mxu0
        %v905 = vadd.f32 0.0, %v904
        %906 = vmatprep.mubr.bf16.mxu0 %v731
        %907 = vmatmul.mubr.bf16.gmra.mrb[0].mxu0 %v413
        %v908 = vpop.f32.mrb[0].mxu0
        %v909 = vadd.f32 0.0, %v908
        %v910 = vpop.f32.mrb[0].mxu0
        %v911 = vadd.f32 0.0, %v910
        %v912 = vpop.f32.mrb[0].mxu0
        %v913 = vadd.f32 0.0, %v912
        %v914 = vpop.f32.mrb[0].mxu0
        %v915 = vadd.f32 0.0, %v914
        %916 = vmatprep.mubr.bf16.mxu0 %v734
        %917 = vmatmul.mubr.bf16.gmra.mrb[0].mxu0 %v429
        %v918 = vpop.f32.mrb[0].mxu0
        %v919 = vadd.f32 0.0, %v918
        %v920 = vpop.f32.mrb[0].mxu0
        %v921 = vadd.f32 0.0, %v920
        %v922 = vpop.f32.mrb[0].mxu0
        %v923 = vadd.f32 0.0, %v922
        %v924 = vpop.f32.mrb[0].mxu0
        %v925 = vadd.f32 0.0, %v924
        %926 = vmatprep.mubr.bf16.mxu0 %v737
        %927 = vmatmul.mubr.bf16.gmra.mrb[0].mxu0 %v445
        %v928 = vpop.f32.mrb[0].mxu0
        %v929 = vadd.f32 0.0, %v928
        %v930 = vpop.f32.mrb[0].mxu0
        %v931 = vadd.f32 0.0, %v930
        %v932 = vpop.f32.mrb[0].mxu0
        %v933 = vadd.f32 0.0, %v932
        %v934 = vpop.f32.mrb[0].mxu0
        %v935 = vadd.f32 0.0, %v934
        %936 = vmatprep.mubr.bf16.mxu0 %v740
        %937 = vmatmul.mubr.bf16.gmra.mrb[0].mxu0 %v461
        %v938 = vpop.f32.mrb[0].mxu0
        %v939 = vadd.f32 0.0, %v938
        %v940 = vpop.f32.mrb[0].mxu0
        %v941 = vadd.f32 0.0, %v940
        %v942 = vpop.f32.mrb[0].mxu0
        %v943 = vadd.f32 0.0, %v942
        %v944 = vpop.f32.mrb[0].mxu0
        %v945 = vadd.f32 0.0, %v944
        %946 = vmatprep.mubr.bf16.mxu0 %v743
        %947 = vmatmul.mubr.bf16.gmra.mrb[0].mxu0 %v477
        %v948 = vpop.f32.mrb[0].mxu0
        %v949 = vadd.f32 0.0, %v948
        %v950 = vpop.f32.mrb[0].mxu0
        %v951 = vadd.f32 0.0, %v950
        %v952 = vpop.f32.mrb[0].mxu0
        %v953 = vadd.f32 0.0, %v952
        %v954 = vpop.f32.mrb[0].mxu0
        %v955 = vadd.f32 0.0, %v954
        %956 = vmatprep.mubr.bf16.mxu0 %v746
        %957 = vmatmul.mubr.bf16.gmra.mrb[0].mxu0 %v493
        %v958 = vpop.f32.mrb[0].mxu0
        %v959 = vadd.f32 0.0, %v958
        %v960 = vpop.f32.mrb[0].mxu0
        %v961 = vadd.f32 0.0, %v960
        %v962 = vpop.f32.mrb[0].mxu0
        %v963 = vadd.f32 0.0, %v962
        %v964 = vpop.f32.mrb[0].mxu0
        %v965 = vadd.f32 0.0, %v964
        %966 = vmatprep.mubr.bf16.mxu0 %v749
        %967 = vmatmul.mubr.bf16.gmra.mrb[0].mxu0 %v509
        %v968 = vpop.f32.mrb[0].mxu0
        %v969 = vadd.f32 0.0, %v968
        %v970 = vpop.f32.mrb[0].mxu0
        %v971 = vadd.f32 0.0, %v970
        %v972 = vpop.f32.mrb[0].mxu0
        %v973 = vadd.f32 0.0, %v972
        %v974 = vpop.f32.mrb[0].mxu0
        %v975 = vadd.f32 0.0, %v974
        %976 = vdwg.mxu0
        %v1017 = vunpack.c.l.b16 %v263
        %v1018 = vunpack.c.h.b16 %v263
        %v1019 = vunpack.c.l.b16 %v264
        %v1020 = vunpack.c.h.b16 %v264
        %v1021 = vunpack.c.l.b16 %v265
        %v1022 = vunpack.c.h.b16 %v265
        %v1023 = vunpack.c.l.b16 %v266
        %v1024 = vunpack.c.h.b16 %v266
        %v1025 = vunpack.c.l.b16 %v267
        %v1026 = vunpack.c.h.b16 %v267
        %v1027 = vunpack.c.l.b16 %v268
        %v1028 = vunpack.c.h.b16 %v268
        %v1029 = vunpack.c.l.b16 %v269
        %v1030 = vunpack.c.h.b16 %v269
        %v1031 = vunpack.c.l.b16 %v270
        %v1032 = vunpack.c.h.b16 %v270
        %v1033 = vunpack.c.l.b16 %v271
        %v1034 = vunpack.c.h.b16 %v271
        %v1035 = vunpack.c.l.b16 %v272
        %v1036 = vunpack.c.h.b16 %v272
        %v1037 = vunpack.c.l.b16 %v273
        %v1038 = vunpack.c.h.b16 %v273
        %v1039 = vunpack.c.l.b16 %v274
        %v1040 = vunpack.c.h.b16 %v274
        %v1041 = vunpack.c.l.b16 %v275
        %v1042 = vunpack.c.h.b16 %v275
        %v1043 = vunpack.c.l.b16 %v276
        %v1044 = vunpack.c.h.b16 %v276
        %v1045 = vunpack.c.l.b16 %v277
        %v1046 = vunpack.c.h.b16 %v277
        %v1047 = vunpack.c.l.b16 %v278
        %v1048 = vunpack.c.h.b16 %v278
        %v1049 = vunpack.c.l.b16 %v279
        %v1050 = vunpack.c.h.b16 %v279
        %v1051 = vunpack.c.l.b16 %v280
        %v1052 = vunpack.c.h.b16 %v280
        %v1053 = vunpack.c.l.b16 %v281
        %v1054 = vunpack.c.h.b16 %v281
        %v1055 = vunpack.c.l.b16 %v282
        %v1056 = vunpack.c.h.b16 %v282
        %v1057 = vunpack.c.l.b16 %v283
        %v1058 = vunpack.c.h.b16 %v283
        %v1059 = vunpack.c.l.b16 %v284
        %v1060 = vunpack.c.h.b16 %v284
        %v1061 = vunpack.c.l.b16 %v285
        %v1062 = vunpack.c.h.b16 %v285
        %v1063 = vunpack.c.l.b16 %v286
        %v1064 = vunpack.c.h.b16 %v286
        %v1065 = vunpack.c.l.b16 %v287
        %v1066 = vunpack.c.h.b16 %v287
        %v1067 = vunpack.c.l.b16 %v288
        %v1068 = vunpack.c.h.b16 %v288
        %v1069 = vunpack.c.l.b16 %v289
        %v1070 = vunpack.c.h.b16 %v289
        %v1071 = vunpack.c.l.b16 %v290
        %v1072 = vunpack.c.h.b16 %v290
        %v1073 = vunpack.c.l.b16 %v291
        %v1074 = vunpack.c.h.b16 %v291
        %v1075 = vunpack.c.l.b16 %v292
        %v1076 = vunpack.c.h.b16 %v292
        %v1077 = vunpack.c.l.b16 %v293
        %v1078 = vunpack.c.h.b16 %v293
        %v1079 = vunpack.c.l.b16 %v294
        %v1080 = vunpack.c.h.b16 %v294
        %v1081 = vunpack.c.l.b16 %v295
        %v1082 = vunpack.c.h.b16 %v295
        %v1083 = vunpack.c.l.b16 %v296
        %v1084 = vunpack.c.h.b16 %v296
        %v1085 = vunpack.c.l.b16 %v297
        %v1086 = vunpack.c.h.b16 %v297
        %v1087 = vunpack.c.l.b16 %v298
        %v1088 = vunpack.c.h.b16 %v298
        %v1089 = vunpack.c.l.b16 %v299
        %v1090 = vunpack.c.h.b16 %v299
        %v1091 = vunpack.c.l.b16 %v300
        %v1092 = vunpack.c.h.b16 %v300
        %v1093 = vunpack.c.l.b16 %v301
        %v1094 = vunpack.c.h.b16 %v301
        %v1095 = vunpack.c.l.b16 %v302
        %v1096 = vunpack.c.h.b16 %v302
        %v1097 = vpack.c.b16 %v1021, %v1017
        %v1098 = vpack.c.b16 %v1022, %v1018
        %v1099 = vpack.c.b16 %v1023, %v1019
        %v1100 = vpack.c.b16 %v1024, %v1020
        %v1101 = vpack.c.b16 %v1029, %v1025
        %v1102 = vpack.c.b16 %v1030, %v1026
        %v1103 = vpack.c.b16 %v1031, %v1027
        %v1104 = vpack.c.b16 %v1032, %v1028
        %v1105 = vpack.c.b16 %v1037, %v1033
        %v1106 = vpack.c.b16 %v1038, %v1034
        %v1107 = vpack.c.b16 %v1039, %v1035
        %v1108 = vpack.c.b16 %v1040, %v1036
        %v1109 = vpack.c.b16 %v1045, %v1041
        %v1110 = vpack.c.b16 %v1046, %v1042
        %v1111 = vpack.c.b16 %v1047, %v1043
        %v1112 = vpack.c.b16 %v1048, %v1044
        %v1113 = vpack.c.b16 %v1053, %v1049
        %v1114 = vpack.c.b16 %v1054, %v1050
        %v1115 = vpack.c.b16 %v1055, %v1051
        %v1116 = vpack.c.b16 %v1056, %v1052
        %v1117 = vpack.c.b16 %v1061, %v1057
        %v1118 = vpack.c.b16 %v1062, %v1058
        %v1119 = vpack.c.b16 %v1063, %v1059
        %v1120 = vpack.c.b16 %v1064, %v1060
        %v1121 = vpack.c.b16 %v1069, %v1065
        %v1122 = vpack.c.b16 %v1070, %v1066
        %v1123 = vpack.c.b16 %v1071, %v1067
        %v1124 = vpack.c.b16 %v1072, %v1068
        %v1125 = vpack.c.b16 %v1077, %v1073
        %v1126 = vpack.c.b16 %v1078, %v1074
        %v1127 = vpack.c.b16 %v1079, %v1075
        %v1128 = vpack.c.b16 %v1080, %v1076
        %v1129 = vpack.c.b16 %v1085, %v1081
        %v1130 = vpack.c.b16 %v1086, %v1082
        %v1131 = vpack.c.b16 %v1087, %v1083
        %v1132 = vpack.c.b16 %v1088, %v1084
        %v1133 = vpack.c.b16 %v1093, %v1089
        %v1134 = vpack.c.b16 %v1094, %v1090
        %v1135 = vpack.c.b16 %v1095, %v1091
        %v1136 = vpack.c.b16 %v1096, %v1092
        %v1177 = vsel %vm726, %v364, 0
        %v1179 = vsel %vm726, %v366, 0
        %v1181 = vsel %vm726, %v368, 0
        %v1183 = vsel %vm726, %v370, 0
        %v1185 = vsel %vm726, %v372, 0
        %v1187 = vsel %vm726, %v374, 0
        %v1189 = vsel %vm726, %v376, 0
        %v1191 = vsel %vm726, %v378, 0
        %1193 = vmatprep.subr.bf16.mxu0 %v1098
        %1194 = vmatpush1.bf16.msra.mxu0 %v1097
        %1195 = vmatprep.subr.bf16.mxu0 %v1102
        %1196 = vmatpush1.bf16.msra.mxu0 %v1101
        %1197 = vmatprep.subr.bf16.mxu0 %v1106
        %1198 = vmatpush1.bf16.msra.mxu0 %v1105
        %1199 = vmatprep.subr.bf16.mxu0 %v1110
        %1200 = vmatpush1.bf16.msra.mxu0 %v1109
        %1201 = vmatprep.subr.bf16.mxu0 %v1114
        %1202 = vmatpush1.bf16.msra.mxu0 %v1113
        %1203 = vmatprep.subr.bf16.mxu0 %v1118
        %1204 = vmatpush1.bf16.msra.mxu0 %v1117
        %1205 = vmatprep.subr.bf16.mxu0 %v1122
        %1206 = vmatpush1.bf16.msra.mxu0 %v1121
        %1207 = vmatprep.subr.bf16.mxu0 %v1126
        %1208 = vmatpush1.bf16.msra.mxu0 %v1125
        %1209 = vmatprep.subr.bf16.mxu0 %v1130
        %1210 = vmatpush1.bf16.msra.mxu0 %v1129
        %1211 = vmatprep.subr.bf16.mxu0 %v1134
        %1212 = vmatpush1.bf16.msra.mxu0 %v1133
        %1213 = vmatprep.subr.bf16.mxu0 0
        %1214 = vmatpush1.bf16.msra.mxu0 0
        %1215 = vmatprep.subr.bf16.mxu0 0
        %1216 = vmatpush1.bf16.msra.mxu0 0
        %1217 = vmatprep.subr.bf16.mxu0 0
        %1218 = vmatpush1.bf16.msra.mxu0 0
        %1219 = vmatprep.subr.bf16.mxu0 0
        %1220 = vmatpush1.bf16.msra.mxu0 0
        %1221 = vmatprep.subr.bf16.mxu0 0
        %1222 = vmatpush1.bf16.msra.mxu0 0
        %1223 = vmatprep.subr.bf16.mxu0 0
        %1224 = vmatpush1.bf16.msra.mxu0 0
        %1225 = vmatprep.mubr.bf16.mxu0 %v1177
        %1226 = vmatmul.mubr.bf16.gmra.mrb[0].mxu0 %v363
        %v1227 = vpop.f32.mrb[0].mxu0
        %v1228 = vadd.f32 %v786, %v1227
        %v1229 = vpop.f32.mrb[0].mxu0
        %v1230 = vadd.f32 %v788, %v1229
        %v1231 = vpop.f32.mrb[0].mxu0
        %v1232 = vadd.f32 %v790, %v1231
        %v1233 = vpop.f32.mrb[0].mxu0
        %v1234 = vadd.f32 %v792, %v1233
        %1235 = vmatprep.mubr.bf16.mxu0 %v1179
        %1236 = vmatmul.mubr.bf16.gmra.mrb[0].mxu0 %v365
        %v1237 = vpop.f32.mrb[0].mxu0
        %v1238 = vadd.f32 %v796, %v1237
        %v1239 = vpop.f32.mrb[0].mxu0
        %v1240 = vadd.f32 %v798, %v1239
        %v1241 = vpop.f32.mrb[0].mxu0
        %v1242 = vadd.f32 %v800, %v1241
        %v1243 = vpop.f32.mrb[0].mxu0
        %v1244 = vadd.f32 %v802, %v1243
        %1245 = vmatprep.mubr.bf16.mxu0 %v1181
        %1246 = vmatmul.mubr.bf16.gmra.mrb[0].mxu0 %v367
        %v1247 = vpop.f32.mrb[0].mxu0
        %v1248 = vadd.f32 %v806, %v1247
        %v1249 = vpop.f32.mrb[0].mxu0
        %v1250 = vadd.f32 %v808, %v1249
        %v1251 = vpop.f32.mrb[0].mxu0
        %v1252 = vadd.f32 %v810, %v1251
        %v1253 = vpop.f32.mrb[0].mxu0
        %v1254 = vadd.f32 %v812, %v1253
        %1255 = vmatprep.mubr.bf16.mxu0 %v1183
        %1256 = vmatmul.mubr.bf16.gmra.mrb[0].mxu0 %v369
        %v1257 = vpop.f32.mrb[0].mxu0
        %v1258 = vadd.f32 %v816, %v1257
        %v1259 = vpop.f32.mrb[0].mxu0
        %v1260 = vadd.f32 %v818, %v1259
        %v1261 = vpop.f32.mrb[0].mxu0
        %v1262 = vadd.f32 %v820, %v1261
        %v1263 = vpop.f32.mrb[0].mxu0
        %v1264 = vadd.f32 %v822, %v1263
        %1265 = vmatprep.mubr.bf16.mxu0 %v1185
        %1266 = vmatmul.mubr.bf16.gmra.mrb[0].mxu0 %v371
        %v1267 = vpop.f32.mrb[0].mxu0
        %v1268 = vadd.f32 %v826, %v1267
        %v1269 = vpop.f32.mrb[0].mxu0
        %v1270 = vadd.f32 %v828, %v1269
        %v1271 = vpop.f32.mrb[0].mxu0
        %v1272 = vadd.f32 %v830, %v1271
        %v1273 = vpop.f32.mrb[0].mxu0
        %v1274 = vadd.f32 %v832, %v1273
        %1275 = vmatprep.mubr.bf16.mxu0 %v1187
        %1276 = vmatmul.mubr.bf16.gmra.mrb[0].mxu0 %v373
        %v1277 = vpop.f32.mrb[0].mxu0
        %v1278 = vadd.f32 %v836, %v1277
        %v1279 = vpop.f32.mrb[0].mxu0
        %v1280 = vadd.f32 %v838, %v1279
        %v1281 = vpop.f32.mrb[0].mxu0
        %v1282 = vadd.f32 %v840, %v1281
        %v1283 = vpop.f32.mrb[0].mxu0
        %v1284 = vadd.f32 %v842, %v1283
        %1285 = vmatprep.mubr.bf16.mxu0 %v1189
        %1286 = vmatmul.mubr.bf16.gmra.mrb[0].mxu0 %v375
        %v1287 = vpop.f32.mrb[0].mxu0
        %v1288 = vadd.f32 %v846, %v1287
        %v1289 = vpop.f32.mrb[0].mxu0
        %v1290 = vadd.f32 %v848, %v1289
        %v1291 = vpop.f32.mrb[0].mxu0
        %v1292 = vadd.f32 %v850, %v1291
        %v1293 = vpop.f32.mrb[0].mxu0
        %v1294 = vadd.f32 %v852, %v1293
        %1295 = vmatprep.mubr.bf16.mxu0 %v1191
        %1296 = vmatmul.mubr.bf16.gmra.mrb[0].mxu0 %v377
        %v1297 = vpop.f32.mrb[0].mxu0
        %v1298 = vadd.f32 %v856, %v1297
        %v1299 = vpop.f32.mrb[0].mxu0
        %v1300 = vadd.f32 %v858, %v1299
        %v1301 = vpop.f32.mrb[0].mxu0
        %v1302 = vadd.f32 %v860, %v1301
        %v1303 = vpop.f32.mrb[0].mxu0
        %v1304 = vadd.f32 %v862, %v1303
        %1305 = vdwg.mxu0
        %1306 = vmatprep.subr.bf16.mxu0 %v1100
        %1307 = vmatpush1.bf16.msra.mxu0 %v1099
        %1308 = vmatprep.subr.bf16.mxu0 %v1104
        %1309 = vmatpush1.bf16.msra.mxu0 %v1103
        %1310 = vmatprep.subr.bf16.mxu0 %v1108
        %1311 = vmatpush1.bf16.msra.mxu0 %v1107
        %1312 = vmatprep.subr.bf16.mxu0 %v1112
        %1313 = vmatpush1.bf16.msra.mxu0 %v1111
        %1314 = vmatprep.subr.bf16.mxu0 %v1116
        %1315 = vmatpush1.bf16.msra.mxu0 %v1115
        %1316 = vmatprep.subr.bf16.mxu0 %v1120
        %1317 = vmatpush1.bf16.msra.mxu0 %v1119
        %1318 = vmatprep.subr.bf16.mxu0 %v1124
        %1319 = vmatpush1.bf16.msra.mxu0 %v1123
        %1320 = vmatprep.subr.bf16.mxu0 %v1128
        %1321 = vmatpush1.bf16.msra.mxu0 %v1127
        %1322 = vmatprep.subr.bf16.mxu0 %v1132
        %1323 = vmatpush1.bf16.msra.mxu0 %v1131
        %1324 = vmatprep.subr.bf16.mxu0 %v1136
        %1325 = vmatpush1.bf16.msra.mxu0 %v1135
        %1326 = vmatprep.subr.bf16.mxu0 0
        %1327 = vmatpush1.bf16.msra.mxu0 0
        %1328 = vmatprep.subr.bf16.mxu0 0
        %1329 = vmatpush1.bf16.msra.mxu0 0
        %1330 = vmatprep.subr.bf16.mxu0 0
        %1331 = vmatpush1.bf16.msra.mxu0 0
        %1332 = vmatprep.subr.bf16.mxu0 0
        %1333 = vmatpush1.bf16.msra.mxu0 0
        %1334 = vmatprep.subr.bf16.mxu0 0
        %1335 = vmatpush1.bf16.msra.mxu0 0
        %1336 = vmatprep.subr.bf16.mxu0 0
        %1337 = vmatpush1.bf16.msra.mxu0 0
        %1338 = vmatprep.mubr.bf16.mxu0 %v1177
        %1339 = vmatmul.mubr.bf16.gmra.mrb[0].mxu0 %v363
        %v1340 = vpop.f32.mrb[0].mxu0
        %v1341 = vadd.f32 %v899, %v1340
        %v1342 = vpop.f32.mrb[0].mxu0
        %v1343 = vadd.f32 %v901, %v1342
        %v1344 = vpop.f32.mrb[0].mxu0
        %v1345 = vadd.f32 %v903, %v1344
        %v1346 = vpop.f32.mrb[0].mxu0
        %v1347 = vadd.f32 %v905, %v1346
        %1348 = vmatprep.mubr.bf16.mxu0 %v1179
        %1349 = vmatmul.mubr.bf16.gmra.mrb[0].mxu0 %v365
        %v1350 = vpop.f32.mrb[0].mxu0
        %v1351 = vadd.f32 %v909, %v1350
        %v1352 = vpop.f32.mrb[0].mxu0
        %v1353 = vadd.f32 %v911, %v1352
        %v1354 = vpop.f32.mrb[0].mxu0
        %v1355 = vadd.f32 %v913, %v1354
        %v1356 = vpop.f32.mrb[0].mxu0
        %v1357 = vadd.f32 %v915, %v1356
        %1358 = vmatprep.mubr.bf16.mxu0 %v1181
        %1359 = vmatmul.mubr.bf16.gmra.mrb[0].mxu0 %v367
        %v1360 = vpop.f32.mrb[0].mxu0
        %v1361 = vadd.f32 %v919, %v1360
        %v1362 = vpop.f32.mrb[0].mxu0
        %v1363 = vadd.f32 %v921, %v1362
        %v1364 = vpop.f32.mrb[0].mxu0
        %v1365 = vadd.f32 %v923, %v1364
        %v1366 = vpop.f32.mrb[0].mxu0
        %v1367 = vadd.f32 %v925, %v1366
        %1368 = vmatprep.mubr.bf16.mxu0 %v1183
        %1369 = vmatmul.mubr.bf16.gmra.mrb[0].mxu0 %v369
        %v1370 = vpop.f32.mrb[0].mxu0
        %v1371 = vadd.f32 %v929, %v1370
        %v1372 = vpop.f32.mrb[0].mxu0
        %v1373 = vadd.f32 %v931, %v1372
        %v1374 = vpop.f32.mrb[0].mxu0
        %v1375 = vadd.f32 %v933, %v1374
        %v1376 = vpop.f32.mrb[0].mxu0
        %v1377 = vadd.f32 %v935, %v1376
        %1378 = vmatprep.mubr.bf16.mxu0 %v1185
        %1379 = vmatmul.mubr.bf16.gmra.mrb[0].mxu0 %v371
        %v1380 = vpop.f32.mrb[0].mxu0
        %v1381 = vadd.f32 %v939, %v1380
        %v1382 = vpop.f32.mrb[0].mxu0
        %v1383 = vadd.f32 %v941, %v1382
        %v1384 = vpop.f32.mrb[0].mxu0
        %v1385 = vadd.f32 %v943, %v1384
        %v1386 = vpop.f32.mrb[0].mxu0
        %v1387 = vadd.f32 %v945, %v1386
        %1388 = vmatprep.mubr.bf16.mxu0 %v1187
        %1389 = vmatmul.mubr.bf16.gmra.mrb[0].mxu0 %v373
        %v1390 = vpop.f32.mrb[0].mxu0
        %v1391 = vadd.f32 %v949, %v1390
        %v1392 = vpop.f32.mrb[0].mxu0
        %v1393 = vadd.f32 %v951, %v1392
        %v1394 = vpop.f32.mrb[0].mxu0
        %v1395 = vadd.f32 %v953, %v1394
        %v1396 = vpop.f32.mrb[0].mxu0
        %v1397 = vadd.f32 %v955, %v1396
        %1398 = vmatprep.mubr.bf16.mxu0 %v1189
        %1399 = vmatmul.mubr.bf16.gmra.mrb[0].mxu0 %v375
        %v1400 = vpop.f32.mrb[0].mxu0
        %v1401 = vadd.f32 %v959, %v1400
        %v1402 = vpop.f32.mrb[0].mxu0
        %v1403 = vadd.f32 %v961, %v1402
        %v1404 = vpop.f32.mrb[0].mxu0
        %v1405 = vadd.f32 %v963, %v1404
        %v1406 = vpop.f32.mrb[0].mxu0
        %v1407 = vadd.f32 %v965, %v1406
        %1408 = vmatprep.mubr.bf16.mxu0 %v1191
        %1409 = vmatmul.mubr.bf16.gmra.mrb[0].mxu0 %v377
        %v1410 = vpop.f32.mrb[0].mxu0
        %v1411 = vadd.f32 %v969, %v1410
        %v1412 = vpop.f32.mrb[0].mxu0
        %v1413 = vadd.f32 %v971, %v1412
        %v1414 = vpop.f32.mrb[0].mxu0
        %v1415 = vadd.f32 %v973, %v1414
        %v1416 = vpop.f32.mrb[0].mxu0
        %v1417 = vadd.f32 %v975, %v1416
        %1418 = vdwg.mxu0
        %vm1428 = vcmask 1046528
        %v1429 = vrot.slane %v363, 1
        %v1430 = vrot.slane %v365, 1
        %v1431 = vsel %vm1428, %v1429, %v1430
        %v1432 = vrot.slane %v367, 1
        %v1433 = vsel %vm1428, %v1430, %v1432
        %v1434 = vrot.slane %v369, 1
        %v1435 = vsel %vm1428, %v1432, %v1434
        %v1436 = vrot.slane %v371, 1
        %v1437 = vsel %vm1428, %v1434, %v1436
        %v1438 = vrot.slane %v373, 1
        %v1439 = vsel %vm1428, %v1436, %v1438
        %v1440 = vrot.slane %v375, 1
        %v1441 = vsel %vm1428, %v1438, %v1440
        %v1442 = vrot.slane %v377, 1
        %v1443 = vsel %vm1428, %v1440, %v1442
        %v1444 = vrot.slane %v379, 1
        %v1445 = vsel %vm1428, %v1442, %v1444
        %v1466 = vunpack.c.l.b16 %v343
        %v1467 = vunpack.c.h.b16 %v343
        %v1468 = vunpack.c.l.b16 %v344
        %v1469 = vunpack.c.h.b16 %v344
        %v1470 = vunpack.c.l.b16 %v345
        %v1471 = vunpack.c.h.b16 %v345
        %v1472 = vunpack.c.l.b16 %v346
        %v1473 = vunpack.c.h.b16 %v346
        %v1474 = vunpack.c.l.b16 %v347
        %v1475 = vunpack.c.h.b16 %v347
        %v1476 = vunpack.c.l.b16 %v348
        %v1477 = vunpack.c.h.b16 %v348
        %v1478 = vunpack.c.l.b16 %v349
        %v1479 = vunpack.c.h.b16 %v349
        %v1480 = vunpack.c.l.b16 %v350
        %v1481 = vunpack.c.h.b16 %v350
        %v1482 = vunpack.c.l.b16 %v351
        %v1483 = vunpack.c.h.b16 %v351
        %v1484 = vunpack.c.l.b16 %v352
        %v1485 = vunpack.c.h.b16 %v352
        %v1486 = vunpack.c.l.b16 %v353
        %v1487 = vunpack.c.h.b16 %v353
        %v1488 = vunpack.c.l.b16 %v354
        %v1489 = vunpack.c.h.b16 %v354
        %v1490 = vunpack.c.l.b16 %v355
        %v1491 = vunpack.c.h.b16 %v355
        %v1492 = vunpack.c.l.b16 %v356
        %v1493 = vunpack.c.h.b16 %v356
        %v1494 = vunpack.c.l.b16 %v357
        %v1495 = vunpack.c.h.b16 %v357
        %v1496 = vunpack.c.l.b16 %v358
        %v1497 = vunpack.c.h.b16 %v358
        %v1498 = vunpack.c.l.b16 %v359
        %v1499 = vunpack.c.h.b16 %v359
        %v1500 = vunpack.c.l.b16 %v360
        %v1501 = vunpack.c.h.b16 %v360
        %v1502 = vunpack.c.l.b16 %v361
        %v1503 = vunpack.c.h.b16 %v361
        %v1504 = vunpack.c.l.b16 %v362
        %v1505 = vunpack.c.h.b16 %v362
        %v1506 = vpack.c.b16 %v1470, %v1466
        %v1507 = vpack.c.b16 %v1471, %v1467
        %v1508 = vpack.c.b16 %v1472, %v1468
        %v1509 = vpack.c.b16 %v1473, %v1469
        %v1510 = vpack.c.b16 %v1478, %v1474
        %v1511 = vpack.c.b16 %v1479, %v1475
        %v1512 = vpack.c.b16 %v1480, %v1476
        %v1513 = vpack.c.b16 %v1481, %v1477
        %v1514 = vpack.c.b16 %v1486, %v1482
        %v1515 = vpack.c.b16 %v1487, %v1483
        %v1516 = vpack.c.b16 %v1488, %v1484
        %v1517 = vpack.c.b16 %v1489, %v1485
        %v1518 = vpack.c.b16 %v1494, %v1490
        %v1519 = vpack.c.b16 %v1495, %v1491
        %v1520 = vpack.c.b16 %v1496, %v1492
        %v1521 = vpack.c.b16 %v1497, %v1493
        %v1522 = vpack.c.b16 %v1502, %v1498
        %v1523 = vpack.c.b16 %v1503, %v1499
        %v1524 = vpack.c.b16 %v1504, %v1500
        %v1525 = vpack.c.b16 %v1505, %v1501
        %vm1546 = vcmask 654336
        %v1548 = vsel %vm1546, %v1431, 0
        %v1551 = vsel %vm1546, %v1433, 0
        %v1554 = vsel %vm1546, %v1435, 0
        %v1557 = vsel %vm1546, %v1437, 0
        %v1560 = vsel %vm1546, %v1439, 0
        %v1563 = vsel %vm1546, %v1441, 0
        %v1566 = vsel %vm1546, %v1443, 0
        %v1569 = vsel %vm1546, %v1445, 0
        %1571 = vmatprep.subr.bf16.mxu0 %v1507
        %1572 = vmatpush1.bf16.msra.mxu0 %v1506
        %1573 = vmatprep.subr.bf16.mxu0 %v1511
        %1574 = vmatpush1.bf16.msra.mxu0 %v1510
        %1575 = vmatprep.subr.bf16.mxu0 %v1515
        %1576 = vmatpush1.bf16.msra.mxu0 %v1514
        %1577 = vmatprep.subr.bf16.mxu0 %v1519
        %1578 = vmatpush1.bf16.msra.mxu0 %v1518
        %1579 = vmatprep.subr.bf16.mxu0 %v1523
        %1580 = vmatpush1.bf16.msra.mxu0 %v1522
        %1581 = vmatprep.subr.bf16.mxu0 0
        %1582 = vmatpush1.bf16.msra.mxu0 0
        %1583 = vmatprep.subr.bf16.mxu0 0
        %1584 = vmatpush1.bf16.msra.mxu0 0
        %1585 = vmatprep.subr.bf16.mxu0 0
        %1586 = vmatpush1.bf16.msra.mxu0 0
        %1587 = vmatprep.subr.bf16.mxu0 0
        %1588 = vmatpush1.bf16.msra.mxu0 0
        %1589 = vmatprep.subr.bf16.mxu0 0
        %1590 = vmatpush1.bf16.msra.mxu0 0
        %1591 = vmatprep.subr.bf16.mxu0 0
        %1592 = vmatpush1.bf16.msra.mxu0 0
        %1593 = vmatprep.subr.bf16.mxu0 0
        %1594 = vmatpush1.bf16.msra.mxu0 0
        %1595 = vmatprep.subr.bf16.mxu0 0
        %1596 = vmatpush1.bf16.msra.mxu0 0
        %1597 = vmatprep.subr.bf16.mxu0 0
        %1598 = vmatpush1.bf16.msra.mxu0 0
        %1599 = vmatprep.subr.bf16.mxu0 0
        %1600 = vmatpush1.bf16.msra.mxu0 0
        %1601 = vmatprep.subr.bf16.mxu0 0
        %1602 = vmatpush1.bf16.msra.mxu0 0
        %1603 = vmatprep.mubr.bf16.mxu0 0
        %1604 = vmatmul.mubr.bf16.gmra.mrb[0].mxu0 %v1548
        %v1605 = vpop.f32.mrb[0].mxu0
        %v1606 = vadd.f32 0.0, %v1605
        %v1607 = vpop.f32.mrb[0].mxu0
        %v1608 = vadd.f32 0.0, %v1607
        %v1609 = vpop.f32.mrb[0].mxu0
        %v1610 = vadd.f32 0.0, %v1609
        %v1611 = vpop.f32.mrb[0].mxu0
        %v1612 = vadd.f32 0.0, %v1611
        %1613 = vmatprep.mubr.bf16.mxu0 0
        %1614 = vmatmul.mubr.bf16.gmra.mrb[0].mxu0 %v1551
        %v1615 = vpop.f32.mrb[0].mxu0
        %v1616 = vadd.f32 0.0, %v1615
        %v1617 = vpop.f32.mrb[0].mxu0
        %v1618 = vadd.f32 0.0, %v1617
        %v1619 = vpop.f32.mrb[0].mxu0
        %v1620 = vadd.f32 0.0, %v1619
        %v1621 = vpop.f32.mrb[0].mxu0
        %v1622 = vadd.f32 0.0, %v1621
        %1623 = vmatprep.mubr.bf16.mxu0 0
        %1624 = vmatmul.mubr.bf16.gmra.mrb[0].mxu0 %v1554
        %v1625 = vpop.f32.mrb[0].mxu0
        %v1626 = vadd.f32 0.0, %v1625
        %v1627 = vpop.f32.mrb[0].mxu0
        %v1628 = vadd.f32 0.0, %v1627
        %v1629 = vpop.f32.mrb[0].mxu0
        %v1630 = vadd.f32 0.0, %v1629
        %v1631 = vpop.f32.mrb[0].mxu0
        %v1632 = vadd.f32 0.0, %v1631
        %1633 = vmatprep.mubr.bf16.mxu0 0
        %1634 = vmatmul.mubr.bf16.gmra.mrb[0].mxu0 %v1557
        %v1635 = vpop.f32.mrb[0].mxu0
        %v1636 = vadd.f32 0.0, %v1635
        %v1637 = vpop.f32.mrb[0].mxu0
        %v1638 = vadd.f32 0.0, %v1637
        %v1639 = vpop.f32.mrb[0].mxu0
        %v1640 = vadd.f32 0.0, %v1639
        %v1641 = vpop.f32.mrb[0].mxu0
        %v1642 = vadd.f32 0.0, %v1641
        %1643 = vmatprep.mubr.bf16.mxu0 0
        %1644 = vmatmul.mubr.bf16.gmra.mrb[0].mxu0 %v1560
        %v1645 = vpop.f32.mrb[0].mxu0
        %v1646 = vadd.f32 0.0, %v1645
        %v1647 = vpop.f32.mrb[0].mxu0
        %v1648 = vadd.f32 0.0, %v1647
        %v1649 = vpop.f32.mrb[0].mxu0
        %v1650 = vadd.f32 0.0, %v1649
        %v1651 = vpop.f32.mrb[0].mxu0
        %v1652 = vadd.f32 0.0, %v1651
        %1653 = vmatprep.mubr.bf16.mxu0 0
        %1654 = vmatmul.mubr.bf16.gmra.mrb[0].mxu0 %v1563
        %v1655 = vpop.f32.mrb[0].mxu0
        %v1656 = vadd.f32 0.0, %v1655
        %v1657 = vpop.f32.mrb[0].mxu0
        %v1658 = vadd.f32 0.0, %v1657
        %v1659 = vpop.f32.mrb[0].mxu0
        %v1660 = vadd.f32 0.0, %v1659
        %v1661 = vpop.f32.mrb[0].mxu0
        %v1662 = vadd.f32 0.0, %v1661
        %1663 = vmatprep.mubr.bf16.mxu0 0
        %1664 = vmatmul.mubr.bf16.gmra.mrb[0].mxu0 %v1566
        %v1665 = vpop.f32.mrb[0].mxu0
        %v1666 = vadd.f32 0.0, %v1665
        %v1667 = vpop.f32.mrb[0].mxu0
        %v1668 = vadd.f32 0.0, %v1667
        %v1669 = vpop.f32.mrb[0].mxu0
        %v1670 = vadd.f32 0.0, %v1669
        %v1671 = vpop.f32.mrb[0].mxu0
        %v1672 = vadd.f32 0.0, %v1671
        %1673 = vmatprep.mubr.bf16.mxu0 0
        %1674 = vmatmul.mubr.bf16.gmra.mrb[0].mxu0 %v1569
        %v1675 = vpop.f32.mrb[0].mxu0
        %v1676 = vadd.f32 0.0, %v1675
        %v1677 = vpop.f32.mrb[0].mxu0
        %v1678 = vadd.f32 0.0, %v1677
        %v1679 = vpop.f32.mrb[0].mxu0
        %v1680 = vadd.f32 0.0, %v1679
        %v1681 = vpop.f32.mrb[0].mxu0
        %v1682 = vadd.f32 0.0, %v1681
        %1683 = vdwg.mxu0
        %1684 = vmatprep.subr.bf16.mxu0 %v1509
        %1685 = vmatpush1.bf16.msra.mxu0 %v1508
        %1686 = vmatprep.subr.bf16.mxu0 %v1513
        %1687 = vmatpush1.bf16.msra.mxu0 %v1512
        %1688 = vmatprep.subr.bf16.mxu0 %v1517
        %1689 = vmatpush1.bf16.msra.mxu0 %v1516
        %1690 = vmatprep.subr.bf16.mxu0 %v1521
        %1691 = vmatpush1.bf16.msra.mxu0 %v1520
        %1692 = vmatprep.subr.bf16.mxu0 %v1525
        %1693 = vmatpush1.bf16.msra.mxu0 %v1524
        %1694 = vmatprep.subr.bf16.mxu0 0
        %1695 = vmatpush1.bf16.msra.mxu0 0
        %1696 = vmatprep.subr.bf16.mxu0 0
        %1697 = vmatpush1.bf16.msra.mxu0 0
        %1698 = vmatprep.subr.bf16.mxu0 0
        %1699 = vmatpush1.bf16.msra.mxu0 0
        %1700 = vmatprep.subr.bf16.mxu0 0
        %1701 = vmatpush1.bf16.msra.mxu0 0
        %1702 = vmatprep.subr.bf16.mxu0 0
        %1703 = vmatpush1.bf16.msra.mxu0 0
        %1704 = vmatprep.subr.bf16.mxu0 0
        %1705 = vmatpush1.bf16.msra.mxu0 0
        %1706 = vmatprep.subr.bf16.mxu0 0
        %1707 = vmatpush1.bf16.msra.mxu0 0
        %1708 = vmatprep.subr.bf16.mxu0 0
        %1709 = vmatpush1.bf16.msra.mxu0 0
        %1710 = vmatprep.subr.bf16.mxu0 0
        %1711 = vmatpush1.bf16.msra.mxu0 0
        %1712 = vmatprep.subr.bf16.mxu0 0
        %1713 = vmatpush1.bf16.msra.mxu0 0
        %1714 = vmatprep.subr.bf16.mxu0 0
        %1715 = vmatpush1.bf16.msra.mxu0 0
        %1716 = vmatprep.mubr.bf16.mxu0 0
        %1717 = vmatmul.mubr.bf16.gmra.mrb[0].mxu0 %v1548
        %v1718 = vpop.f32.mrb[0].mxu0
        %v1719 = vadd.f32 0.0, %v1718
        %v1720 = vpop.f32.mrb[0].mxu0
        %v1721 = vadd.f32 0.0, %v1720
        %v1722 = vpop.f32.mrb[0].mxu0
        %v1723 = vadd.f32 0.0, %v1722
        %v1724 = vpop.f32.mrb[0].mxu0
        %v1725 = vadd.f32 0.0, %v1724
        %1726 = vmatprep.mubr.bf16.mxu0 0
        %1727 = vmatmul.mubr.bf16.gmra.mrb[0].mxu0 %v1551
        %v1728 = vpop.f32.mrb[0].mxu0
        %v1729 = vadd.f32 0.0, %v1728
        %v1730 = vpop.f32.mrb[0].mxu0
        %v1731 = vadd.f32 0.0, %v1730
        %v1732 = vpop.f32.mrb[0].mxu0
        %v1733 = vadd.f32 0.0, %v1732
        %v1734 = vpop.f32.mrb[0].mxu0
        %v1735 = vadd.f32 0.0, %v1734
        %1736 = vmatprep.mubr.bf16.mxu0 0
        %1737 = vmatmul.mubr.bf16.gmra.mrb[0].mxu0 %v1554
        %v1738 = vpop.f32.mrb[0].mxu0
        %v1739 = vadd.f32 0.0, %v1738
        %v1740 = vpop.f32.mrb[0].mxu0
        %v1741 = vadd.f32 0.0, %v1740
        %v1742 = vpop.f32.mrb[0].mxu0
        %v1743 = vadd.f32 0.0, %v1742
        %v1744 = vpop.f32.mrb[0].mxu0
        %v1745 = vadd.f32 0.0, %v1744
        %1746 = vmatprep.mubr.bf16.mxu0 0
        %1747 = vmatmul.mubr.bf16.gmra.mrb[0].mxu0 %v1557
        %v1748 = vpop.f32.mrb[0].mxu0
        %v1749 = vadd.f32 0.0, %v1748
        %v1750 = vpop.f32.mrb[0].mxu0
        %v1751 = vadd.f32 0.0, %v1750
        %v1752 = vpop.f32.mrb[0].mxu0
        %v1753 = vadd.f32 0.0, %v1752
        %v1754 = vpop.f32.mrb[0].mxu0
        %v1755 = vadd.f32 0.0, %v1754
        %1756 = vmatprep.mubr.bf16.mxu0 0
        %1757 = vmatmul.mubr.bf16.gmra.mrb[0].mxu0 %v1560
        %v1758 = vpop.f32.mrb[0].mxu0
        %v1759 = vadd.f32 0.0, %v1758
        %v1760 = vpop.f32.mrb[0].mxu0
        %v1761 = vadd.f32 0.0, %v1760
        %v1762 = vpop.f32.mrb[0].mxu0
        %v1763 = vadd.f32 0.0, %v1762
        %v1764 = vpop.f32.mrb[0].mxu0
        %v1765 = vadd.f32 0.0, %v1764
        %1766 = vmatprep.mubr.bf16.mxu0 0
        %1767 = vmatmul.mubr.bf16.gmra.mrb[0].mxu0 %v1563
        %v1768 = vpop.f32.mrb[0].mxu0
        %v1769 = vadd.f32 0.0, %v1768
        %v1770 = vpop.f32.mrb[0].mxu0
        %v1771 = vadd.f32 0.0, %v1770
        %v1772 = vpop.f32.mrb[0].mxu0
        %v1773 = vadd.f32 0.0, %v1772
        %v1774 = vpop.f32.mrb[0].mxu0
        %v1775 = vadd.f32 0.0, %v1774
        %1776 = vmatprep.mubr.bf16.mxu0 0
        %1777 = vmatmul.mubr.bf16.gmra.mrb[0].mxu0 %v1566
        %v1778 = vpop.f32.mrb[0].mxu0
        %v1779 = vadd.f32 0.0, %v1778
        %v1780 = vpop.f32.mrb[0].mxu0
        %v1781 = vadd.f32 0.0, %v1780
        %v1782 = vpop.f32.mrb[0].mxu0
        %v1783 = vadd.f32 0.0, %v1782
        %v1784 = vpop.f32.mrb[0].mxu0
        %v1785 = vadd.f32 0.0, %v1784
        %1786 = vmatprep.mubr.bf16.mxu0 0
        %1787 = vmatmul.mubr.bf16.gmra.mrb[0].mxu0 %v1569
        %v1788 = vpop.f32.mrb[0].mxu0
        %v1789 = vadd.f32 0.0, %v1788
        %v1790 = vpop.f32.mrb[0].mxu0
        %v1791 = vadd.f32 0.0, %v1790
        %v1792 = vpop.f32.mrb[0].mxu0
        %v1793 = vadd.f32 0.0, %v1792
        %v1794 = vpop.f32.mrb[0].mxu0
        %v1795 = vadd.f32 0.0, %v1794
        %1796 = vdwg.mxu0
        %v1797 = vadd.f32 %v1228, %v1606
        %v1798 = vadd.f32 %v1230, %v1608
        %v1799 = vadd.f32 %v1341, %v1719
        %v1800 = vadd.f32 %v1343, %v1721
        %v1801 = vadd.f32 %v1232, %v1610
        %v1802 = vadd.f32 %v1234, %v1612
        %v1803 = vadd.f32 %v1345, %v1723
        %v1804 = vadd.f32 %v1347, %v1725
        %v1805 = vadd.f32 %v1238, %v1616
        %v1806 = vadd.f32 %v1240, %v1618
        %v1807 = vadd.f32 %v1351, %v1729
        %v1808 = vadd.f32 %v1353, %v1731
        %v1809 = vadd.f32 %v1242, %v1620
        %v1810 = vadd.f32 %v1244, %v1622
        %v1811 = vadd.f32 %v1355, %v1733
        %v1812 = vadd.f32 %v1357, %v1735
        %v1813 = vadd.f32 %v1248, %v1626
        %v1814 = vadd.f32 %v1250, %v1628
        %v1815 = vadd.f32 %v1361, %v1739
        %v1816 = vadd.f32 %v1363, %v1741
        %v1817 = vadd.f32 %v1252, %v1630
        %v1818 = vadd.f32 %v1254, %v1632
        %v1819 = vadd.f32 %v1365, %v1743
        %v1820 = vadd.f32 %v1367, %v1745
        %v1821 = vadd.f32 %v1258, %v1636
        %v1822 = vadd.f32 %v1260, %v1638
        %v1823 = vadd.f32 %v1371, %v1749
        %v1824 = vadd.f32 %v1373, %v1751
        %v1825 = vadd.f32 %v1262, %v1640
        %v1826 = vadd.f32 %v1264, %v1642
        %v1827 = vadd.f32 %v1375, %v1753
        %v1828 = vadd.f32 %v1377, %v1755
        %v1829 = vadd.f32 %v1268, %v1646
        %v1830 = vadd.f32 %v1270, %v1648
        %v1831 = vadd.f32 %v1381, %v1759
        %v1832 = vadd.f32 %v1383, %v1761
        %v1833 = vadd.f32 %v1272, %v1650
        %v1834 = vadd.f32 %v1274, %v1652
        %v1835 = vadd.f32 %v1385, %v1763
        %v1836 = vadd.f32 %v1387, %v1765
        %v1837 = vadd.f32 %v1278, %v1656
        %v1838 = vadd.f32 %v1280, %v1658
        %v1839 = vadd.f32 %v1391, %v1769
        %v1840 = vadd.f32 %v1393, %v1771
        %v1841 = vadd.f32 %v1282, %v1660
        %v1842 = vadd.f32 %v1284, %v1662
        %v1843 = vadd.f32 %v1395, %v1773
        %v1844 = vadd.f32 %v1397, %v1775
        %v1845 = vadd.f32 %v1288, %v1666
        %v1846 = vadd.f32 %v1290, %v1668
        %v1847 = vadd.f32 %v1401, %v1779
        %v1848 = vadd.f32 %v1403, %v1781
        %v1849 = vadd.f32 %v1292, %v1670
        %v1850 = vadd.f32 %v1294, %v1672
        %v1851 = vadd.f32 %v1405, %v1783
        %v1852 = vadd.f32 %v1407, %v1785
        %v1853 = vadd.f32 %v1298, %v1676
        %v1854 = vadd.f32 %v1300, %v1678
        %v1855 = vadd.f32 %v1411, %v1789
        %v1856 = vadd.f32 %v1413, %v1791
        %v1857 = vadd.f32 %v1302, %v1680
        %v1858 = vadd.f32 %v1304, %v1682
        %v1859 = vadd.f32 %v1415, %v1793
        %v1860 = vadd.f32 %v1417, %v1795
        %v1861 = vmul.f32 %v1797, %v1797
        %v1862 = vmul.f32 %v1798, %v1798
        %v1863 = vmul.f32 %v1801, %v1801
        %v1864 = vmul.f32 %v1802, %v1802
        %v1865 = vmul.f32 %v1805, %v1805
        %v1866 = vmul.f32 %v1806, %v1806
        %v1867 = vmul.f32 %v1809, %v1809
        %v1868 = vmul.f32 %v1810, %v1810
        %v1869 = vmul.f32 %v1813, %v1813
        %v1870 = vmul.f32 %v1814, %v1814
        %v1871 = vmul.f32 %v1817, %v1817
        %v1872 = vmul.f32 %v1818, %v1818
        %v1873 = vmul.f32 %v1821, %v1821
        %v1874 = vmul.f32 %v1822, %v1822
        %v1875 = vmul.f32 %v1825, %v1825
        %v1876 = vmul.f32 %v1826, %v1826
        %v1877 = vmul.f32 %v1829, %v1829
        %v1878 = vmul.f32 %v1830, %v1830
        %v1879 = vmul.f32 %v1833, %v1833
        %v1880 = vmul.f32 %v1834, %v1834
        %v1881 = vmul.f32 %v1837, %v1837
        %v1882 = vmul.f32 %v1838, %v1838
        %v1883 = vmul.f32 %v1841, %v1841
        %v1884 = vmul.f32 %v1842, %v1842
        %v1885 = vmul.f32 %v1845, %v1845
        %v1886 = vmul.f32 %v1846, %v1846
        %v1887 = vmul.f32 %v1849, %v1849
        %v1888 = vmul.f32 %v1850, %v1850
        %v1889 = vmul.f32 %v1853, %v1853
        %v1890 = vmul.f32 %v1854, %v1854
        %v1891 = vmul.f32 %v1857, %v1857
        %v1892 = vmul.f32 %v1858, %v1858
        %v1893 = vmul.f32 %v1799, %v1799
        %v1894 = vmul.f32 %v1800, %v1800
        %v1895 = vmul.f32 %v1803, %v1803
        %v1896 = vmul.f32 %v1804, %v1804
        %v1897 = vmul.f32 %v1807, %v1807
        %v1898 = vmul.f32 %v1808, %v1808
        %v1899 = vmul.f32 %v1811, %v1811
        %v1900 = vmul.f32 %v1812, %v1812
        %v1901 = vmul.f32 %v1815, %v1815
        %v1902 = vmul.f32 %v1816, %v1816
        %v1903 = vmul.f32 %v1819, %v1819
        %v1904 = vmul.f32 %v1820, %v1820
        %v1905 = vmul.f32 %v1823, %v1823
        %v1906 = vmul.f32 %v1824, %v1824
        %v1907 = vmul.f32 %v1827, %v1827
        %v1908 = vmul.f32 %v1828, %v1828
        %v1909 = vmul.f32 %v1831, %v1831
        %v1910 = vmul.f32 %v1832, %v1832
        %v1911 = vmul.f32 %v1835, %v1835
        %v1912 = vmul.f32 %v1836, %v1836
        %v1913 = vmul.f32 %v1839, %v1839
        %v1914 = vmul.f32 %v1840, %v1840
        %v1915 = vmul.f32 %v1843, %v1843
        %v1916 = vmul.f32 %v1844, %v1844
        %v1917 = vmul.f32 %v1847, %v1847
        %v1918 = vmul.f32 %v1848, %v1848
        %v1919 = vmul.f32 %v1851, %v1851
        %v1920 = vmul.f32 %v1852, %v1852
        %v1921 = vmul.f32 %v1855, %v1855
        %v1922 = vmul.f32 %v1856, %v1856
        %v1923 = vmul.f32 %v1859, %v1859
        %v1924 = vmul.f32 %v1860, %v1860
        %v1925 = vadd.f32 %v1861, %v1893
        %v1926 = vadd.f32 %v1862, %v1894
        %v1927 = vadd.f32 %v1863, %v1895
        %v1928 = vadd.f32 %v1864, %v1896
        %v1929 = vadd.f32 %v1865, %v1897
        %v1930 = vadd.f32 %v1866, %v1898
        %v1931 = vadd.f32 %v1867, %v1899
        %v1932 = vadd.f32 %v1868, %v1900
        %v1933 = vadd.f32 %v1869, %v1901
        %v1934 = vadd.f32 %v1870, %v1902
        %v1935 = vadd.f32 %v1871, %v1903
        %v1936 = vadd.f32 %v1872, %v1904
        %v1937 = vadd.f32 %v1873, %v1905
        %v1938 = vadd.f32 %v1874, %v1906
        %v1939 = vadd.f32 %v1875, %v1907
        %v1940 = vadd.f32 %v1876, %v1908
        %v1941 = vadd.f32 %v1877, %v1909
        %v1942 = vadd.f32 %v1878, %v1910
        %v1943 = vadd.f32 %v1879, %v1911
        %v1944 = vadd.f32 %v1880, %v1912
        %v1945 = vadd.f32 %v1881, %v1913
        %v1946 = vadd.f32 %v1882, %v1914
        %v1947 = vadd.f32 %v1883, %v1915
        %v1948 = vadd.f32 %v1884, %v1916
        %v1949 = vadd.f32 %v1885, %v1917
        %v1950 = vadd.f32 %v1886, %v1918
        %v1951 = vadd.f32 %v1887, %v1919
        %v1952 = vadd.f32 %v1888, %v1920
        %v1953 = vadd.f32 %v1889, %v1921
        %v1954 = vadd.f32 %v1890, %v1922
        %v1955 = vadd.f32 %v1891, %v1923
        %v1956 = vadd.f32 %v1892, %v1924
        %v1957 = vpack.c.bf16 %v1927, %v1925
        %v1958 = vpack.c.bf16 %v1928, %v1926
        %v1959 = vpack.c.bf16 %v1931, %v1929
        %v1960 = vpack.c.bf16 %v1932, %v1930
        %v1961 = vpack.c.bf16 %v1935, %v1933
        %v1962 = vpack.c.bf16 %v1936, %v1934
        %v1963 = vpack.c.bf16 %v1939, %v1937
        %v1964 = vpack.c.bf16 %v1940, %v1938
        %v1965 = vpack.c.bf16 %v1943, %v1941
        %v1966 = vpack.c.bf16 %v1944, %v1942
        %v1967 = vpack.c.bf16 %v1947, %v1945
        %v1968 = vpack.c.bf16 %v1948, %v1946
        %v1969 = vpack.c.bf16 %v1951, %v1949
        %v1970 = vpack.c.bf16 %v1952, %v1950
        %v1971 = vpack.c.bf16 %v1955, %v1953
        %v1972 = vpack.c.bf16 %v1956, %v1954
        %v1973 = vld [vmem:[%s2] sm:$0xf]
        %v1974 = vld [vmem:[%s2 + $0x4] sm:$0xf]
        %v1975 = vld [vmem:[%s2 + $0x8] sm:$0xf]
        %v1976 = vld [vmem:[%s2 + $0xc] sm:$0xf]
        %v1977 = vld [vmem:[%s2 + $0x10] sm:$0xf]
        %v1978 = vld [vmem:[%s2 + $0x14] sm:$0xf]
        %v1979 = vld [vmem:[%s2 + $0x18] sm:$0xf]
        %v1980 = vld [vmem:[%s2 + $0x1c] sm:$0xf]
        %v1981 = vld [vmem:[%s2 + $0x20] sm:$0xf]
        %v1982 = vld [vmem:[%s2 + $0x24] sm:$0xf]
        %v1983 = vld [vmem:[%s2 + $0x28] sm:$0xf]
        %v1984 = vld [vmem:[%s2 + $0x2c] sm:$0xf]
        %v1985 = vld [vmem:[%s2 + $0x30] sm:$0xf]
        %v1986 = vld [vmem:[%s2 + $0x34] sm:$0xf]
        %v1987 = vld [vmem:[%s2 + $0x38] sm:$0xf]
        %v1988 = vld [vmem:[%s2 + $0x3c] sm:$0xf]
        %v1989 = vld [vmem:[%s2 + $0x40] sm:$0xf]
        %v1990 = vld [vmem:[%s2 + $0x44] sm:$0xf]
        %v1991 = vld [vmem:[%s2 + $0x48] sm:$0xf]
        %v1992 = vld [vmem:[%s2 + $0x4c] sm:$0xf]
        %v1993 = vld [vmem:[%s2 + $0x50] sm:$0xf]
        %v1994 = vld [vmem:[%s2 + $0x54] sm:$0xf]
        %v1995 = vld [vmem:[%s2 + $0x58] sm:$0xf]
        %v1996 = vld [vmem:[%s2 + $0x5c] sm:$0xf]
        %v1997 = vld [vmem:[%s2 + $0x60] sm:$0xf]
        %v1998 = vld [vmem:[%s2 + $0x64] sm:$0xf]
        %v1999 = vld [vmem:[%s2 + $0x68] sm:$0xf]
        %v2000 = vld [vmem:[%s2 + $0x6c] sm:$0xf]
        %v2001 = vld [vmem:[%s2 + $0x70] sm:$0xf]
        %v2002 = vld [vmem:[%s2 + $0x74] sm:$0xf]
        %v2003 = vld [vmem:[%s2 + $0x78] sm:$0xf]
        %v2004 = vld [vmem:[%s2 + $0x7c] sm:$0xf]
        %v2037 = vunpack.c.l.b16 %v1973
        %v2038 = vunpack.c.l.b16 %v1974
        %v2039 = vunpack.c.l.b16 %v1975
        %v2040 = vunpack.c.l.b16 %v1976
        %v2041 = vunpack.c.l.b16 %v1977
        %v2042 = vunpack.c.l.b16 %v1978
        %v2043 = vunpack.c.l.b16 %v1979
        %v2044 = vunpack.c.l.b16 %v1980
        %v2045 = vunpack.c.l.b16 %v1981
        %v2046 = vunpack.c.l.b16 %v1982
        %v2047 = vunpack.c.l.b16 %v1983
        %v2048 = vunpack.c.l.b16 %v1984
        %v2049 = vunpack.c.l.b16 %v1985
        %v2050 = vunpack.c.l.b16 %v1986
        %v2051 = vunpack.c.l.b16 %v1987
        %v2052 = vunpack.c.l.b16 %v1988
        %v2053 = vunpack.c.l.b16 %v1989
        %v2054 = vunpack.c.l.b16 %v1990
        %v2055 = vunpack.c.l.b16 %v1991
        %v2056 = vunpack.c.l.b16 %v1992
        %v2057 = vunpack.c.l.b16 %v1993
        %v2058 = vunpack.c.l.b16 %v1994
        %v2059 = vunpack.c.l.b16 %v1995
        %v2060 = vunpack.c.l.b16 %v1996
        %v2061 = vunpack.c.l.b16 %v1997
        %v2062 = vunpack.c.l.b16 %v1998
        %v2063 = vunpack.c.l.b16 %v1999
        %v2064 = vunpack.c.l.b16 %v2000
        %v2065 = vunpack.c.l.b16 %v2001
        %v2066 = vunpack.c.l.b16 %v2002
        %v2067 = vunpack.c.l.b16 %v2003
        %v2068 = vunpack.c.l.b16 %v2004
        %v2069 = vpack.c.b16 %v2038, %v2037
        %v2070 = vpack.c.b16 %v2040, %v2039
        %v2071 = vpack.c.b16 %v2042, %v2041
        %v2072 = vpack.c.b16 %v2044, %v2043
        %v2073 = vpack.c.b16 %v2046, %v2045
        %v2074 = vpack.c.b16 %v2048, %v2047
        %v2075 = vpack.c.b16 %v2050, %v2049
        %v2076 = vpack.c.b16 %v2052, %v2051
        %v2077 = vpack.c.b16 %v2054, %v2053
        %v2078 = vpack.c.b16 %v2056, %v2055
        %v2079 = vpack.c.b16 %v2058, %v2057
        %v2080 = vpack.c.b16 %v2060, %v2059
        %v2081 = vpack.c.b16 %v2062, %v2061
        %v2082 = vpack.c.b16 %v2064, %v2063
        %v2083 = vpack.c.b16 %v2066, %v2065
        %v2084 = vpack.c.b16 %v2068, %v2067
        %2101 = vmatprep.subr.bf16.mxu0 0
        %2102 = vmatpush1.bf16.msra.mxu0 %v2069
        %2103 = vmatprep.subr.bf16.mxu0 0
        %2104 = vmatpush1.bf16.msra.mxu0 %v2070
        %2105 = vmatprep.subr.bf16.mxu0 0
        %2106 = vmatpush1.bf16.msra.mxu0 %v2071
        %2107 = vmatprep.subr.bf16.mxu0 0
        %2108 = vmatpush1.bf16.msra.mxu0 %v2072
        %2109 = vmatprep.subr.bf16.mxu0 0
        %2110 = vmatpush1.bf16.msra.mxu0 %v2073
        %2111 = vmatprep.subr.bf16.mxu0 0
        %2112 = vmatpush1.bf16.msra.mxu0 %v2074
        %2113 = vmatprep.subr.bf16.mxu0 0
        %2114 = vmatpush1.bf16.msra.mxu0 %v2075
        %2115 = vmatprep.subr.bf16.mxu0 0
        %2116 = vmatpush1.bf16.msra.mxu0 %v2076
        %2117 = vmatprep.subr.bf16.mxu0 0
        %2118 = vmatpush1.bf16.msra.mxu0 %v2077
        %2119 = vmatprep.subr.bf16.mxu0 0
        %2120 = vmatpush1.bf16.msra.mxu0 %v2078
        %2121 = vmatprep.subr.bf16.mxu0 0
        %2122 = vmatpush1.bf16.msra.mxu0 %v2079
        %2123 = vmatprep.subr.bf16.mxu0 0
        %2124 = vmatpush1.bf16.msra.mxu0 %v2080
        %2125 = vmatprep.subr.bf16.mxu0 0
        %2126 = vmatpush1.bf16.msra.mxu0 %v2081
        %2127 = vmatprep.subr.bf16.mxu0 0
        %2128 = vmatpush1.bf16.msra.mxu0 %v2082
        %2129 = vmatprep.subr.bf16.mxu0 0
        %2130 = vmatpush1.bf16.msra.mxu0 %v2083
        %2131 = vmatprep.subr.bf16.mxu0 0
        %2132 = vmatpush1.bf16.msra.mxu0 %v2084
        %2133 = vmatprep.mubr.bf16.mxu0 %v1958
        %2134 = vmatmul.mubr.bf16.gmra.mrb[0].mxu0 %v1957
        %v2135 = vpop.f32.mrb[0].mxu0
        %v2136 = vadd.f32 0.0, %v2135
        %v2137 = vpop.f32.mrb[0].mxu0
        %v2138 = vpop.f32.mrb[0].mxu0
        %v2139 = vadd.f32 0.0, %v2138
        %v2140 = vpop.f32.mrb[0].mxu0
        %2141 = vmatprep.mubr.bf16.mxu0 %v1960
        %2142 = vmatmul.mubr.bf16.gmra.mrb[0].mxu0 %v1959
        %v2143 = vpop.f32.mrb[0].mxu0
        %v2144 = vadd.f32 0.0, %v2143
        %v2145 = vpop.f32.mrb[0].mxu0
        %v2146 = vpop.f32.mrb[0].mxu0
        %v2147 = vadd.f32 0.0, %v2146
        %v2148 = vpop.f32.mrb[0].mxu0
        %2149 = vmatprep.mubr.bf16.mxu0 %v1962
        %2150 = vmatmul.mubr.bf16.gmra.mrb[0].mxu0 %v1961
        %v2151 = vpop.f32.mrb[0].mxu0
        %v2152 = vadd.f32 0.0, %v2151
        %v2153 = vpop.f32.mrb[0].mxu0
        %v2154 = vpop.f32.mrb[0].mxu0
        %v2155 = vadd.f32 0.0, %v2154
        %v2156 = vpop.f32.mrb[0].mxu0
        %2157 = vmatprep.mubr.bf16.mxu0 %v1964
        %2158 = vmatmul.mubr.bf16.gmra.mrb[0].mxu0 %v1963
        %v2159 = vpop.f32.mrb[0].mxu0
        %v2160 = vadd.f32 0.0, %v2159
        %v2161 = vpop.f32.mrb[0].mxu0
        %v2162 = vpop.f32.mrb[0].mxu0
        %v2163 = vadd.f32 0.0, %v2162
        %v2164 = vpop.f32.mrb[0].mxu0
        %2165 = vmatprep.mubr.bf16.mxu0 %v1966
        %2166 = vmatmul.mubr.bf16.gmra.mrb[0].mxu0 %v1965
        %v2167 = vpop.f32.mrb[0].mxu0
        %v2168 = vadd.f32 0.0, %v2167
        %v2169 = vpop.f32.mrb[0].mxu0
        %v2170 = vpop.f32.mrb[0].mxu0
        %v2171 = vadd.f32 0.0, %v2170
        %v2172 = vpop.f32.mrb[0].mxu0
        %2173 = vmatprep.mubr.bf16.mxu0 %v1968
        %2174 = vmatmul.mubr.bf16.gmra.mrb[0].mxu0 %v1967
        %v2175 = vpop.f32.mrb[0].mxu0
        %v2176 = vadd.f32 0.0, %v2175
        %v2177 = vpop.f32.mrb[0].mxu0
        %v2178 = vpop.f32.mrb[0].mxu0
        %v2179 = vadd.f32 0.0, %v2178
        %v2180 = vpop.f32.mrb[0].mxu0
        %2181 = vmatprep.mubr.bf16.mxu0 %v1970
        %2182 = vmatmul.mubr.bf16.gmra.mrb[0].mxu0 %v1969
        %v2183 = vpop.f32.mrb[0].mxu0
        %v2184 = vadd.f32 0.0, %v2183
        %v2185 = vpop.f32.mrb[0].mxu0
        %v2186 = vpop.f32.mrb[0].mxu0
        %v2187 = vadd.f32 0.0, %v2186
        %v2188 = vpop.f32.mrb[0].mxu0
        %2189 = vmatprep.mubr.bf16.mxu0 %v1972
        %2190 = vmatmul.mubr.bf16.gmra.mrb[0].mxu0 %v1971
        %v2191 = vpop.f32.mrb[0].mxu0
        %v2192 = vadd.f32 0.0, %v2191
        %v2193 = vpop.f32.mrb[0].mxu0
        %v2194 = vpop.f32.mrb[0].mxu0
        %v2195 = vadd.f32 0.0, %v2194
        %v2196 = vpop.f32.mrb[0].mxu0
        %2197 = vdwg.mxu0
        %v2198 = vlaneseq
        %v2199 = vshrl.u32 %v2198, 7
        %v2200 = vadd.s32 %v2199, 8
        %v2201 = vadd.s32 %v2199, 16
        %v2202 = vadd.s32 %v2199, 24
        %v2203 = vadd.s32 %v2199, 32
        %v2204 = vadd.s32 %v2199, 40
        %v2205 = vadd.s32 %v2199, 48
        %v2206 = vadd.s32 %v2199, 56
        %v2207 = vadd.s32 %v2199, 64
        %v2208 = vadd.s32 %v2199, 72
        %v2209 = vadd.s32 %v2199, 80
        %v2210 = vadd.s32 %v2199, 88
        %v2211 = vadd.s32 %v2199, 96
        %v2212 = vadd.s32 %v2199, 104
        %v2213 = vadd.s32 %v2199, 112
        %v2214 = vadd.s32 %v2199, 120
        %vm2215 = vcmp.lt.s32.totalorder %v2199, 11
        %vm2216 = vcmp.lt.s32.totalorder %v2200, 11
        %vm2217 = vcmp.lt.s32.totalorder %v2201, 11
        %vm2218 = vcmp.lt.s32.totalorder %v2202, 11
        %vm2219 = vcmp.lt.s32.totalorder %v2203, 11
        %vm2220 = vcmp.lt.s32.totalorder %v2204, 11
        %vm2221 = vcmp.lt.s32.totalorder %v2205, 11
        %vm2222 = vcmp.lt.s32.totalorder %v2206, 11
        %vm2223 = vcmp.lt.s32.totalorder %v2207, 11
        %vm2224 = vcmp.lt.s32.totalorder %v2208, 11
        %vm2225 = vcmp.lt.s32.totalorder %v2209, 11
        %vm2226 = vcmp.lt.s32.totalorder %v2210, 11
        %vm2227 = vcmp.lt.s32.totalorder %v2211, 11
        %vm2228 = vcmp.lt.s32.totalorder %v2212, 11
        %vm2229 = vcmp.lt.s32.totalorder %v2213, 11
        %vm2230 = vcmp.lt.s32.totalorder %v2214, 11
        %v2231 = vsel %vm2215, %v2136, 0.0
        %v2232 = vsel %vm2216, %v2139, 0.0
        %v2233 = vsel %vm2217, %v2144, 0.0
        %v2234 = vsel %vm2218, %v2147, 0.0
        %v2235 = vsel %vm2219, %v2152, 0.0
        %v2236 = vsel %vm2220, %v2155, 0.0
        %v2237 = vsel %vm2221, %v2160, 0.0
        %v2238 = vsel %vm2222, %v2163, 0.0
        %v2239 = vsel %vm2223, %v2168, 0.0
        %v2240 = vsel %vm2224, %v2171, 0.0
        %v2241 = vsel %vm2225, %v2176, 0.0
        %v2242 = vsel %vm2226, %v2179, 0.0
        %v2243 = vsel %vm2227, %v2184, 0.0
        %v2244 = vsel %vm2228, %v2187, 0.0
        %v2245 = vsel %vm2229, %v2192, 0.0
        %v2246 = vsel %vm2230, %v2195, 0.0
        %v2247 = vmax.f32 %v2231, %v2235
        %v2248 = vmax.f32 %v2232, %v2236
        %v2249 = vmax.f32 %v2233, %v2237
        %v2250 = vmax.f32 %v2234, %v2238
        %v2251 = vmax.f32 %v2247, %v2239
        %v2252 = vmax.f32 %v2248, %v2240
        %v2253 = vmax.f32 %v2249, %v2241
        %v2254 = vmax.f32 %v2250, %v2242
        %v2255 = vmax.f32 %v2251, %v2243
        %v2256 = vmax.f32 %v2252, %v2244
        %v2257 = vmax.f32 %v2253, %v2245
        %v2258 = vmax.f32 %v2254, %v2246
        %v2259 = vmax.f32 %v2255, %v2256
        %v2260 = vmax.f32 %v2257, %v2258
        %v2261 = vmax.f32 %v2259, %v2260
        %2262 = vmax.xlane.f32.xlu0 %v2261
        %v2263 = vpop.xlane.xlu0 %2262
        %v2264 = vrot.slane %v2263, 4
        %v2265 = vmax.f32 %v2263, %v2264
        %v2266 = vrot.slane %v2265, 2
        %v2267 = vmax.f32 %v2265, %v2266
        %v2268 = vrot.slane %v2267, 1
        %v2269 = vmax.f32 %v2267, %v2268
        %s2270 = vtos %v2269
        %s2271 = smul.f32 %s2270, 1e-08
        %s2272 = smax.f32 %s2271, 1e-10
        %v2273 = vstv %s2272
        %v2274 = vmax.f32 %v2136, %v2273
        %v2275 = vmax.f32 %v2139, %v2273
        %v2276 = vmax.f32 %v2144, %v2273
        %v2277 = vmax.f32 %v2147, %v2273
        %v2278 = vmax.f32 %v2152, %v2273
        %v2279 = vmax.f32 %v2155, %v2273
        %v2280 = vmax.f32 %v2160, %v2273
        %v2281 = vmax.f32 %v2163, %v2273
        %v2282 = vmax.f32 %v2168, %v2273
        %v2283 = vmax.f32 %v2171, %v2273
        %v2284 = vmax.f32 %v2176, %v2273
        %v2285 = vmax.f32 %v2179, %v2273
        %v2286 = vmax.f32 %v2184, %v2273
        %v2287 = vmax.f32 %v2187, %v2273
        %v2288 = vmax.f32 %v2192, %v2273
        %v2289 = vmax.f32 %v2195, %v2273
        %v2290 = vlog2.pop %v2274
        %v2291 = vmul.f32 %v2290, 0.6931472
        %v2292 = vlog2.pop %v2275
        %v2293 = vmul.f32 %v2292, 0.6931472
        %v2294 = vlog2.pop %v2276
        %v2295 = vmul.f32 %v2294, 0.6931472
        %v2296 = vlog2.pop %v2277
        %v2297 = vmul.f32 %v2296, 0.6931472
        %v2298 = vlog2.pop %v2278
        %v2299 = vmul.f32 %v2298, 0.6931472
        %v2300 = vlog2.pop %v2279
        %v2301 = vmul.f32 %v2300, 0.6931472
        %v2302 = vlog2.pop %v2280
        %v2303 = vmul.f32 %v2302, 0.6931472
        %v2304 = vlog2.pop %v2281
        %v2305 = vmul.f32 %v2304, 0.6931472
        %v2306 = vlog2.pop %v2282
        %v2307 = vmul.f32 %v2306, 0.6931472
        %v2308 = vlog2.pop %v2283
        %v2309 = vmul.f32 %v2308, 0.6931472
        %v2310 = vlog2.pop %v2284
        %v2311 = vmul.f32 %v2310, 0.6931472
        %v2312 = vlog2.pop %v2285
        %v2313 = vmul.f32 %v2312, 0.6931472
        %v2314 = vlog2.pop %v2286
        %v2315 = vmul.f32 %v2314, 0.6931472
        %v2316 = vlog2.pop %v2287
        %v2317 = vmul.f32 %v2316, 0.6931472
        %v2318 = vlog2.pop %v2288
        %v2319 = vmul.f32 %v2318, 0.6931472
        %v2320 = vlog2.pop %v2289
        %v2321 = vmul.f32 %v2320, 0.6931472
        %v2322 = vmul.f32 %v2291, 4.3429446
        %v2323 = vmul.f32 %v2293, 4.3429446
        %v2324 = vmul.f32 %v2295, 4.3429446
        %v2325 = vmul.f32 %v2297, 4.3429446
        %v2326 = vmul.f32 %v2299, 4.3429446
        %v2327 = vmul.f32 %v2301, 4.3429446
        %v2328 = vmul.f32 %v2303, 4.3429446
        %v2329 = vmul.f32 %v2305, 4.3429446
        %v2330 = vmul.f32 %v2307, 4.3429446
        %v2331 = vmul.f32 %v2309, 4.3429446
        %v2332 = vmul.f32 %v2311, 4.3429446
        %v2333 = vmul.f32 %v2313, 4.3429446
        %v2334 = vmul.f32 %v2315, 4.3429446
        %v2335 = vmul.f32 %v2317, 4.3429446
        %v2336 = vmul.f32 %v2319, 4.3429446
        %v2337 = vmul.f32 %v2321, 4.3429446
        %v2338 = vpack.c.bf16 %v2323, %v2322
        %v2339 = vpack.c.bf16 %v2325, %v2324
        %v2340 = vpack.c.bf16 %v2327, %v2326
        %v2341 = vpack.c.bf16 %v2329, %v2328
        %v2342 = vpack.c.bf16 %v2331, %v2330
        %v2343 = vpack.c.bf16 %v2333, %v2332
        %v2344 = vpack.c.bf16 %v2335, %v2334
        %v2345 = vpack.c.bf16 %v2337, %v2336
        %v2346 = vld [vmem:[%s3] sm:$0xf]
        %v2347 = vld [vmem:[%s3 + $0x4] sm:$0xf]
        %v2348 = vld [vmem:[%s3 + $0x8] sm:$0xf]
        %v2349 = vld [vmem:[%s3 + $0xc] sm:$0xf]
        %v2350 = vld [vmem:[%s3 + $0x10] sm:$0xf]
        %v2351 = vld [vmem:[%s3 + $0x14] sm:$0xf]
        %v2352 = vld [vmem:[%s3 + $0x18] sm:$0xf]
        %v2353 = vld [vmem:[%s3 + $0x1c] sm:$0xf]
        %v2354 = vld [vmem:[%s3 + $0x20] sm:$0xf]
        %v2355 = vld [vmem:[%s3 + $0x24] sm:$0xf]
        %v2356 = vld [vmem:[%s3 + $0x28] sm:$0xf]
        %v2357 = vld [vmem:[%s3 + $0x2c] sm:$0xf]
        %v2358 = vld [vmem:[%s3 + $0x30] sm:$0xf]
        %v2359 = vld [vmem:[%s3 + $0x34] sm:$0xf]
        %v2360 = vld [vmem:[%s3 + $0x38] sm:$0xf]
        %v2361 = vld [vmem:[%s3 + $0x3c] sm:$0xf]
        %v2378 = vunpack.c.l.b16 %v2346
        %v2379 = vunpack.c.l.b16 %v2347
        %v2380 = vunpack.c.l.b16 %v2348
        %v2381 = vunpack.c.l.b16 %v2349
        %v2382 = vunpack.c.l.b16 %v2350
        %v2383 = vunpack.c.l.b16 %v2351
        %v2384 = vunpack.c.l.b16 %v2352
        %v2385 = vunpack.c.l.b16 %v2353
        %v2386 = vunpack.c.l.b16 %v2354
        %v2387 = vunpack.c.l.b16 %v2355
        %v2388 = vunpack.c.l.b16 %v2356
        %v2389 = vunpack.c.l.b16 %v2357
        %v2390 = vunpack.c.l.b16 %v2358
        %v2391 = vunpack.c.l.b16 %v2359
        %v2392 = vunpack.c.l.b16 %v2360
        %v2393 = vunpack.c.l.b16 %v2361
        %v2394 = vpack.c.b16 %v2379, %v2378
        %v2395 = vpack.c.b16 %v2381, %v2380
        %v2396 = vpack.c.b16 %v2383, %v2382
        %v2397 = vpack.c.b16 %v2385, %v2384
        %v2398 = vpack.c.b16 %v2387, %v2386
        %v2399 = vpack.c.b16 %v2389, %v2388
        %v2400 = vpack.c.b16 %v2391, %v2390
        %v2401 = vpack.c.b16 %v2393, %v2392
        %2410 = vmatprep.subr.bf16.mxu0 0
        %2411 = vmatpush1.bf16.msra.mxu0 %v2394
        %2412 = vmatprep.subr.bf16.mxu0 0
        %2413 = vmatpush1.bf16.msra.mxu0 %v2395
        %2414 = vmatprep.subr.bf16.mxu0 0
        %2415 = vmatpush1.bf16.msra.mxu0 %v2396
        %2416 = vmatprep.subr.bf16.mxu0 0
        %2417 = vmatpush1.bf16.msra.mxu0 %v2397
        %2418 = vmatprep.subr.bf16.mxu0 0
        %2419 = vmatpush1.bf16.msra.mxu0 %v2398
        %2420 = vmatprep.subr.bf16.mxu0 0
        %2421 = vmatpush1.bf16.msra.mxu0 %v2399
        %2422 = vmatprep.subr.bf16.mxu0 0
        %2423 = vmatpush1.bf16.msra.mxu0 %v2400
        %2424 = vmatprep.subr.bf16.mxu0 0
        %2425 = vmatpush1.bf16.msra.mxu0 %v2401
        %2426 = vmatprep.subr.bf16.mxu0 0
        %2427 = vmatpush1.bf16.msra.mxu0 0
        %2428 = vmatprep.subr.bf16.mxu0 0
        %2429 = vmatpush1.bf16.msra.mxu0 0
        %2430 = vmatprep.subr.bf16.mxu0 0
        %2431 = vmatpush1.bf16.msra.mxu0 0
        %2432 = vmatprep.subr.bf16.mxu0 0
        %2433 = vmatpush1.bf16.msra.mxu0 0
        %2434 = vmatprep.subr.bf16.mxu0 0
        %2435 = vmatpush1.bf16.msra.mxu0 0
        %2436 = vmatprep.subr.bf16.mxu0 0
        %2437 = vmatpush1.bf16.msra.mxu0 0
        %2438 = vmatprep.subr.bf16.mxu0 0
        %2439 = vmatpush1.bf16.msra.mxu0 0
        %2440 = vmatprep.subr.bf16.mxu0 0
        %2441 = vmatpush1.bf16.msra.mxu0 0
        %2442 = vmatprep.mubr.bf16.mxu0 0
        %2443 = vmatmul.mubr.bf16.gmra.mrb[0].mxu0 %v2338
        %v2444 = vpop.f32.mrb[0].mxu0
        %v2445 = vadd.f32 0.0, %v2444
        %v2446 = vpop.f32.mrb[0].mxu0
        %v2447 = vpop.f32.mrb[0].mxu0
        %v2448 = vadd.f32 0.0, %v2447
        %v2449 = vpop.f32.mrb[0].mxu0
        %2450 = vmatprep.mubr.bf16.mxu0 0
        %2451 = vmatmul.mubr.bf16.gmra.mrb[0].mxu0 %v2339
        %v2452 = vpop.f32.mrb[0].mxu0
        %v2453 = vadd.f32 0.0, %v2452
        %v2454 = vpop.f32.mrb[0].mxu0
        %v2455 = vpop.f32.mrb[0].mxu0
        %v2456 = vadd.f32 0.0, %v2455
        %v2457 = vpop.f32.mrb[0].mxu0
        %2458 = vmatprep.mubr.bf16.mxu0 0
        %2459 = vmatmul.mubr.bf16.gmra.mrb[0].mxu0 %v2340
        %v2460 = vpop.f32.mrb[0].mxu0
        %v2461 = vadd.f32 0.0, %v2460
        %v2462 = vpop.f32.mrb[0].mxu0
        %v2463 = vpop.f32.mrb[0].mxu0
        %v2464 = vadd.f32 0.0, %v2463
        %v2465 = vpop.f32.mrb[0].mxu0
        %2466 = vmatprep.mubr.bf16.mxu0 0
        %2467 = vmatmul.mubr.bf16.gmra.mrb[0].mxu0 %v2341
        %v2468 = vpop.f32.mrb[0].mxu0
        %v2469 = vadd.f32 0.0, %v2468
        %v2470 = vpop.f32.mrb[0].mxu0
        %v2471 = vpop.f32.mrb[0].mxu0
        %v2472 = vadd.f32 0.0, %v2471
        %v2473 = vpop.f32.mrb[0].mxu0
        %2474 = vmatprep.mubr.bf16.mxu0 0
        %2475 = vmatmul.mubr.bf16.gmra.mrb[0].mxu0 %v2342
        %v2476 = vpop.f32.mrb[0].mxu0
        %v2477 = vadd.f32 0.0, %v2476
        %v2478 = vpop.f32.mrb[0].mxu0
        %v2479 = vpop.f32.mrb[0].mxu0
        %v2480 = vadd.f32 0.0, %v2479
        %v2481 = vpop.f32.mrb[0].mxu0
        %2482 = vmatprep.mubr.bf16.mxu0 0
        %2483 = vmatmul.mubr.bf16.gmra.mrb[0].mxu0 %v2343
        %v2484 = vpop.f32.mrb[0].mxu0
        %v2485 = vadd.f32 0.0, %v2484
        %v2486 = vpop.f32.mrb[0].mxu0
        %v2487 = vpop.f32.mrb[0].mxu0
        %v2488 = vadd.f32 0.0, %v2487
        %v2489 = vpop.f32.mrb[0].mxu0
        %2490 = vmatprep.mubr.bf16.mxu0 0
        %2491 = vmatmul.mubr.bf16.gmra.mrb[0].mxu0 %v2344
        %v2492 = vpop.f32.mrb[0].mxu0
        %v2493 = vadd.f32 0.0, %v2492
        %v2494 = vpop.f32.mrb[0].mxu0
        %v2495 = vpop.f32.mrb[0].mxu0
        %v2496 = vadd.f32 0.0, %v2495
        %v2497 = vpop.f32.mrb[0].mxu0
        %2498 = vmatprep.mubr.bf16.mxu0 0
        %2499 = vmatmul.mubr.bf16.gmra.mrb[0].mxu0 %v2345
        %v2500 = vpop.f32.mrb[0].mxu0
        %v2501 = vadd.f32 0.0, %v2500
        %v2502 = vpop.f32.mrb[0].mxu0
        %v2503 = vpop.f32.mrb[0].mxu0
        %v2504 = vadd.f32 0.0, %v2503
        %v2505 = vpop.f32.mrb[0].mxu0
        %2506 = vdwg.mxu0
        %2507 = vst [vmem:[%s205] sm:$0xff] %v2445
        %2508 = vst [vmem:[%s205 + $0x8] sm:$0xff] %v2448
        %2509 = vst [vmem:[%s205 + $0x10] sm:$0xff] %v2453
        %2510 = vst [vmem:[%s205 + $0x18] sm:$0xff] %v2456
        %2511 = vst [vmem:[%s205 + $0x20] sm:$0xff] %v2461
        %2512 = vst [vmem:[%s205 + $0x28] sm:$0xff] %v2464
        %2513 = vst [vmem:[%s205 + $0x30] sm:$0xff] %v2469
        %2514 = vst [vmem:[%s205 + $0x38] sm:$0xff] %v2472
        %2515 = vst [vmem:[%s205 + $0x40] sm:$0xff] %v2477
        %2516 = vst [vmem:[%s205 + $0x48] sm:$0xff] %v2480
        %2517 = vst [vmem:[%s205 + $0x50] sm:$0xff] %v2485
        %2518 = vst [vmem:[%s205 + $0x58] sm:$0xff] %v2488
        %2519 = vst [vmem:[%s205 + $0x60] sm:$0xff] %v2493
        %2520 = vst [vmem:[%s205 + $0x68] sm:$0xff] %v2496
        %2521 = vst [vmem:[%s205 + $0x70] sm:$0xff] %v2501
        %2522 = vst [vmem:[%s205 + $0x78] sm:$0xff] %v2504
        %s2523 = sand.u32 %s116, 1
        %s2524 = scalar_lea.sflag [#allocation4], %s2523
        %s2525 = sand.u32 %s116, 1
        %s2526 = smul.addr %s2525, 128
        %s2527 = scalar_lea.vmem [#allocation5], %s2526
        // Predicated region
        $region41: #{tpu_custom_call.1} parent=35 // pred_check
          %p2528 = pneg %p126
        $region42: #{tpu_custom_call.1} parent=35 // pred_check_branch
          %2530 = sbr.rel (%p2528) target = $region44
        $region43: #{tpu_custom_call.1} parent=35 // pred_region
          %s2532 = ssub.s32 2048, 2048
          %2533 = vsyncadd %s2524, %s2532
          %s2534 = smul.addr %s19, 16
          %s2535 = smul.addr %s2534, 128
          %s2536 = scalar_lea.hbm %s4, %s2535
          %s2537 = sshll.u32 %s2527, 4
          %s2538 = int_to_ptr.vmem [resolvable:$true] %s2537
          %2543 = dma.vmem_to_hbm [thread:$0]  %s2538, 2048, %s2536, %s2524, 128, 128, 8
        $region44: #{tpu_custom_call.1} parent=35 // pred_fallthru
          _
      $region36: #{tpu_custom_call.1} parent=5 // pred_fallthru
        _
      %p2544 = scmp.le.s32.totalorder 2, %s14
      // Predicated region
      $region45: #{tpu_custom_call.1} parent=5 // pred_check
        %p2545 = pneg %p2544
      $region46: #{tpu_custom_call.1} parent=5 // pred_check_branch
        %2547 = sbr.rel (%p2545) target = $region48
      $region47: #{tpu_custom_call.1} parent=5 // pred_region
        %s2548 = ssub.s32 %s14, 2
        // Predicated region
        $region49: #{tpu_custom_call.1} parent=47 // pred_check
          %p2549 = pneg %p132
        $region50: #{tpu_custom_call.1} parent=47 // pred_check_branch
          %2551 = sbr.rel (%p2549) target = $region52
        $region51: #{tpu_custom_call.1} parent=47 // pred_region
          %s2552 = sand.u32 %s117, 1
          %s2553 = scalar_lea.sflag [#allocation4], %s2552
          %s2554 = sand.u32 %s117, 1
          %s2555 = smul.addr %s2554, 128
          %s2556 = scalar_lea.vmem [#allocation5], %s2555
          %2557 = dma.done %s2553, 2048
        $region52: #{tpu_custom_call.1} parent=47 // pred_fallthru
          _
      $region48: #{tpu_custom_call.1} parent=5 // pred_fallthru
        _
    $region6: #{tpu_custom_call.1} parent=1 // loop_footer
      %s18 = sadd.s32 1, %s14
    $region7: #{tpu_custom_call.1} parent=1 // loop_footer_branch
      %13 = sbr.rel target = $region3
    $region8: #{tpu_custom_call.1} parent=1 // loop_exit
      _
    %2558 = vsyncpa [#allocation3], 1
    %s2559 = scalar_lea.sflag [#allocation3], 1
    %2560 = vsyncpa %s2559, 1
    %2561 = vsyncpa [#allocation4], 1
    %s2562 = scalar_lea.sflag [#allocation4], 1
    %2563 = vsyncpa %s2562, 1

</llo_original>
